<compile_context>
chip_gen: v7x
topology: tpu7x:2x2x1
jax: 0.10.0
libtpu: 0.0.40
codegen_flags: <defaults>
</compile_context>

<pallas_src>
import jax
import jax.numpy as jnp
from jax.experimental import pallas as pl
from jax.experimental.pallas import tpu as pltpu


_VMEM_LIMIT = 32 * 1024 * 1024   # explicit scoped-VMEM request (safe on v5e/v6e/v7x)
_MAX_TILE_N = 1024               # max lane tile for the conv kernels (multiple of 128)
_MAX_TILE_B = 256                # max row tile for the FC kernel (fills 256-wide MXU)


def _round_up(x, m):
    return ((x + m - 1) // m) * m


def _cdiv(a, b):
    return -(-a // b)


def _pick_tile(n, max_tile, align, min_steps=2):
    """Pick (tile, padded_n): tile multiple of `align`, tile <= max_tile,
    >= min_steps grid steps when n allows it, and minimal padding (instead of
    rounding n up to a whole max tile)."""
    na = _round_up(n, align)
    steps = max(_cdiv(na, max_tile),
                min_steps if na >= min_steps * align else 1)
    tile = min(max_tile, _round_up(_cdiv(na, steps), align))
    steps = _cdiv(na, tile)
    return tile, steps * tile


# ---------------------------------------------------------------------------
# Pallas kernels
# ---------------------------------------------------------------------------
def conv_relu_pool_kernel(s_ref, w_ref, b_ref, o_ref):
    """Fused 3x3 SAME conv + bias + ReLU + 2x2 maxpool on one lane tile.

    s_ref: (16*Cin, TN)      stride-2 slabs of the zero-padded input; row
                             (r*4+c)*Cin + ci holds x_pad[ci, r+2*oh, c+2*ow]
                             flattened over n = (batch, oh, ow), r, c in 0..3.
    w_ref: (4, Cout, 16*Cin) merged-tap weights, one matrix per pool offset
                             p = pa*2 + pb; column block (r*4+c)*Cin:(+Cin) is
                             w[r-pa, c-pb]^T when valid, else 0.
    b_ref: (Cout, 1)         bias.
    o_ref: (Cout, TN)        pooled activations, lane-dense (TN multiple of 128).
    """
    s = s_ref[...]                                   # streamed slab tile
    running = None
    for p in range(4):                               # 4 pool offsets -> 4 MXU matmuls
        acc = jnp.dot(w_ref[p], s, preferred_element_type=jnp.float32)
        running = acc if running is None else jnp.maximum(running, acc)
    # ReLU is monotone and the bias is shared by all four pool positions, so
    # maxpool(relu(conv + b)) == relu(max_offsets(conv) + b).
    o_ref[...] = jnp.maximum(running + b_ref[...], 0.0)


def fc_stack_kernel(x_ref, w1_ref, b1_ref, w2_ref, b2_ref, w3_ref, b3_ref, o_ref):
    h = jnp.dot(x_ref[...], w1_ref[...], preferred_element_type=jnp.float32) + b1_ref[...]
    h = jnp.maximum(h, 0.0)
    h = jnp.dot(h, w2_ref[...], preferred_element_type=jnp.float32) + b2_ref[...]
    h = jnp.maximum(h, 0.0)
    o_ref[...] = jnp.dot(h, w3_ref[...], preferred_element_type=jnp.float32) + b3_ref[...]


# ---------------------------------------------------------------------------
# pallas_call wrappers (row-tiled 'parallel' grids, weights pinned in VMEM)
# ---------------------------------------------------------------------------
def conv_relu_pool(slabs, w_merged, bias, tile_n):
    rows, npad = slabs.shape                 # rows = 16 * Cin
    cout = w_merged.shape[1]
    return pl.pallas_call(
        conv_relu_pool_kernel,
        out_shape=jax.ShapeDtypeStruct((cout, npad), jnp.float32),
        grid=(npad // tile_n,),
        in_specs=[
            pl.BlockSpec((rows, tile_n), lambda i: (0, i)),      # streamed slabs
            pl.BlockSpec((4, cout, rows), lambda i: (0, 0, 0)),  # resident weights
            pl.BlockSpec((cout, 1), lambda i: (0, 0)),           # resident bias
        ],
        out_specs=pl.BlockSpec((cout, tile_n), lambda i: (0, i)),
        compiler_params=pltpu.CompilerParams(
            dimension_semantics=("parallel",),
            vmem_limit_bytes=_VMEM_LIMIT),
    )(slabs, w_merged, bias)


def fc_stack(x, w1, b1, w2, b2, w3, b3, tile_b):
    bpad, din = x.shape
    dh1, dh2, dout = w1.shape[1], w2.shape[1], w3.shape[1]
    return pl.pallas_call(
        fc_stack_kernel,
        out_shape=jax.ShapeDtypeStruct((bpad, dout), jnp.float32),
        grid=(bpad // tile_b,),
        in_specs=[
            pl.BlockSpec((tile_b, din), lambda i: (i, 0)),       # streamed rows
            pl.BlockSpec((din, dh1), lambda i: (0, 0)),          # resident weights
            pl.BlockSpec((1, dh1), lambda i: (0, 0)),
            pl.BlockSpec((dh1, dh2), lambda i: (0, 0)),
            pl.BlockSpec((1, dh2), lambda i: (0, 0)),
            pl.BlockSpec((dh2, dout), lambda i: (0, 0)),
            pl.BlockSpec((1, dout), lambda i: (0, 0)),
        ],
        out_specs=pl.BlockSpec((tile_b, dout), lambda i: (i, 0)),
        compiler_params=pltpu.CompilerParams(
            dimension_semantics=("parallel",),
            vmem_limit_bytes=_VMEM_LIMIT),
    )(x, w1, b1, w2, b2, w3, b3)


# ---------------------------------------------------------------------------
# JAX glue: stride-2 slab extraction + merged-tap weight packing
# ---------------------------------------------------------------------------
def _pool_conv_slabs(x_cf, npad):
    """x_cf: (C, B, H, W) channel-first, H and W even.

    Returns sublane-dense slabs (16*C, npad): row (r*4+c)*C + ci holds
    x_pad[ci, :, r + 2*oh, c + 2*ow] flattened over (B, oh, ow).  Only ~4x
    replication of the padded input (vs ~9x for full im2col); the big N axis
    sits on lanes and the leading axis is fully dense (no 1->8 sublane pad)."""
    c, b, h, w = x_cf.shape
    ho, wo = h // 2, w // 2
    n = b * ho * wo
    xp = jnp.pad(x_cf, ((0, 0), (0, 0), (1, 1), (1, 1)))
    slabs = []
    for r in range(4):
        for cc in range(4):
            sl = xp[:, :, r:r + 2 * ho - 1:2, cc:cc + 2 * wo - 1:2]   # (C, B, Ho, Wo)
            slabs.append(sl.reshape(c, n))
    st = jnp.concatenate(slabs, axis=0)                               # (16*C, N)
    if npad != n:
        st = jnp.pad(st, ((0, 0), (0, npad - n)))
    return st


def _merged_pool_weights(w_hwio, cout_pad=None):
    """(3, 3, cin, cout) -> (4, cout_p, 16*cin) merged-tap matrices.

    Offset index p = pa*2 + pb.  Column block (r*4+c)*cin : (r*4+c+1)*cin equals
    w[r-pa, c-pb]^T when both kernel offsets are in 0..2, else zero, so
    conv value at pool offset (pa, pb) == W_p @ slab_tile."""
    _, _, cin, cout = w_hwio.shape
    cp = cout if cout_pad is None else cout_pad
    w_t = jnp.transpose(w_hwio, (0, 1, 3, 2)).astype(jnp.float32)   # (3,3,cout,cin)
    zeros = jnp.zeros((cout, cin), jnp.float32)
    mats = []
    for pa in range(2):
        for pb in range(2):
            blocks = []
            for r in range(4):
                for c in range(4):
                    kh, kw = r - pa, c - pb
                    ok = (0 <= kh <= 2) and (0 <= kw <= 2)
                    blocks.append(w_t[kh, kw] if ok else zeros)
            m = jnp.concatenate(blocks, axis=1)                      # (cout, 16*cin)
            if cp != cout:
                m = jnp.pad(m, ((0, cp - cout), (0, 0)))
            mats.append(m)
    return jnp.stack(mats, axis=0)                                   # (4, cout_p, 16*cin)


def _pad2(a, rows, cols):
    return jnp.pad(a, ((0, rows - a.shape[0]), (0, cols - a.shape[1])))


# ---------------------------------------------------------------------------
# Parameters (deterministic synthetic init; PyTorch-equivalent shapes)
# ---------------------------------------------------------------------------
def init_params(key, n_class):
    ks = jax.random.split(key, 10)

    def rnd(k, shape, scale):
        return jax.random.normal(k, shape, dtype=jnp.float32) * scale

    return dict(
        c1w=rnd(ks[0], (3, 3, 1, 6), 0.2),        # conv1: (kh, kw, cin, cout)
        c1b=rnd(ks[1], (6,), 0.1),
        c2w=rnd(ks[2], (3, 3, 6, 16), 0.1),       # conv2
        c2b=rnd(ks[3], (16,), 0.1),
        f1w=rnd(ks[4], (16 * 8 * 8, 120), 0.05),  # fc1 (in, out)
        f1b=rnd(ks[5], (120,), 0.05),
        f2w=rnd(ks[6], (120, 84), 0.05),
        f2b=rnd(ks[7], (84,), 0.05),
        f3w=rnd(ks[8], (84, n_class), 0.05),
        f3b=rnd(ks[9], (n_class,), 0.05),
    )


# ---------------------------------------------------------------------------
# Forward pass (Pallas) and pure-JAX reference
# ---------------------------------------------------------------------------
@jax.jit
def symbolnet_forward(x_nchw, params):
    x = x_nchw.astype(jnp.float32)
    b, cin0, h, w = x.shape
    assert cin0 == 1 and h % 4 == 0 and w % 4 == 0, "expects single-channel, H,W % 4 == 0"
    h1, w1 = h // 2, w // 2
    h2, w2 = h1 // 2, w1 // 2
    n_class = params['f3w'].shape[1]

    # ---- conv1 + ReLU + 2x2 maxpool (fused); Cout padded 6 -> 8 -----------
    x_cf = jnp.transpose(x, (1, 0, 2, 3))                        # (1, B, H, W)
    n1 = b * h1 * w1
    tile_n1, npad1 = _pick_tile(n1, _MAX_TILE_N, 128)
    s1 = _pool_conv_slabs(x_cf, npad1)                           # (16, npad1)
    w1m = _merged_pool_weights(params['c1w'], cout_pad=8)        # (4, 8, 16)
    b1v = jnp.pad(params['c1b'], (0, 2)).reshape(-1, 1)          # (8, 1)
    y1 = conv_relu_pool(s1, w1m, b1v, tile_n1)                   # (8, npad1)
    y1_cf = y1[:, :n1].reshape(8, b, h1, w1)                     # channels 6,7 are 0

    # ---- conv2 + ReLU + 2x2 maxpool (fused); Cin padded 6 -> 8 ------------
    n2 = b * h2 * w2
    tile_n2, npad2 = _pick_tile(n2, _MAX_TILE_N, 128)
    s2 = _pool_conv_slabs(y1_cf, npad2)                          # (128, npad2)
    c2w_p = jnp.pad(params['c2w'], ((0, 0), (0, 0), (0, 2), (0, 0)))
    w2m = _merged_pool_weights(c2w_p)                            # (4, 16, 128)
    b2v = params['c2b'].reshape(-1, 1)
    y2 = conv_relu_pool(s2, w2m, b2v, tile_n2)                   # (16, npad2)
    y2_cf = y2[:, :n2].reshape(16, b, h2, w2)

    # ---- flatten in PyTorch (C, H, W) order (only the batch axis moves) ---
    feat = jnp.transpose(y2_cf, (1, 0, 2, 3)).reshape(b, 16 * h2 * w2)

    # ---- fused fc1/relu/fc2/relu/fc3; hidden/class dims padded to 128 -----
    dh1, dh2 = 128, 128
    dout = _round_up(n_class, 128)
    tile_b, bpad = _pick_tile(b, _MAX_TILE_B, 8)
    feat_p = jnp.pad(feat, ((0, bpad - b), (0, 0)))
    logits = fc_stack(
        feat_p,
        _pad2(params['f1w'], feat.shape[1], dh1),
        _pad2(params['f1b'].reshape(1, -1), 1, dh1),
        _pad2(params['f2w'], dh1, dh2),
        _pad2(params['f2b'].reshape(1, -1), 1, dh2),
        _pad2(params['f3w'], dh2, dout),
        _pad2(params['f3b'].reshape(1, -1), 1, dout),
        tile_b)
    return logits[:b, :n_class]


def reference_forward(x_nchw, params):
    x = jnp.transpose(x_nchw, (0, 2, 3, 1)).astype(jnp.float32)

    def conv_relu(v, w, bias):
        y = jax.lax.conv_general_dilated(
            v, w, window_strides=(1, 1), padding='SAME',
            dimension_numbers=('NHWC', 'HWIO', 'NHWC'))
        return jnp.maximum(y + bias, 0.0)

    def pool(v):
        return jax.lax.reduce_window(v, -jnp.inf, jax.lax.max,
                                     (1, 2, 2, 1), (1, 2, 2, 1), 'VALID')

    y = pool(conv_relu(x, params['c1w'], params['c1b']))
    y = pool(conv_relu(y, params['c2w'], params['c2b']))
    feat = jnp.transpose(y, (0, 3, 1, 2)).reshape(x.shape[0], -1)
    h = jnp.maximum(feat @ params['f1w'] + params['f1b'], 0.0)
    h = jnp.maximum(h @ params['f2w'] + params['f2b'], 0.0)
    return h @ params['f3w'] + params['f3b']


if __name__ == "__main__":
    n_class = 4
    key = jax.random.PRNGKey(0)
    kx, kp = jax.random.split(key)
    # fc1 expects 16*8*8 features => 32x32 single-channel inputs (NCHW, like PyTorch)
    x = jax.random.normal(kx, (2, 1, 32, 32), dtype=jnp.float32)
    params = init_params(kp, n_class)

    out = jax.block_until_ready(symbolnet_forward(x, params))
    assert out.shape == (2, n_class)

    ref = reference_forward(x, params)
    if not jnp.allclose(out, ref, atol=1e-3, rtol=1e-3):
        raise AssertionError("Pallas output does not match pure-JAX reference")

    print("KERNEL_OK")
</pallas_src>

<mosaic_0001>
module attributes {stable_mosaic.version = 11 : i64} {
  func.func @conv_relu_pool_kernel(%arg0: i32, %arg1: memref<16x256xf32, #tpu.memory_space<vmem>>, %arg2: memref<4x8x16xf32, #tpu.memory_space<vmem>>, %arg3: memref<8x1xf32, #tpu.memory_space<vmem>>, %arg4: memref<8x256xf32, #tpu.memory_space<vmem>>) attributes {dimension_semantics = [#tpu.dimension_semantics<parallel>], iteration_bounds = array<i64: 2>, scalar_prefetch = 0 : i64, scratch_operands = 0 : i64, tpu.core_type = #tpu.core_type<tc>, window_params = [{transform_indices = @transform_0, window_bounds = array<i64: 16, 256>}, {pipeline_mode = #tpu.pipeline_mode<synchronous>, transform_indices = @transform_1, window_bounds = array<i64: 4, 8, 16>}, {pipeline_mode = #tpu.pipeline_mode<synchronous>, transform_indices = @transform_2, window_bounds = array<i64: 8, 1>}, {transform_indices = @transform_3, window_bounds = array<i64: 8, 256>}]} {
    %c0 = arith.constant 0 : index
    %c0_0 = arith.constant 0 : index
    %0 = vector.load %arg1[%c0, %c0_0] : memref<16x256xf32, #tpu.memory_space<vmem>>, vector<16x256xf32>
    %c0_1 = arith.constant 0 : index
    %c0_2 = arith.constant 0 : index
    %c0_3 = arith.constant 0 : index
    %1 = vector.load %arg2[%c0_1, %c0_2, %c0_3] : memref<4x8x16xf32, #tpu.memory_space<vmem>>, vector<1x8x16xf32>
    %2 = vector.shape_cast %1 : vector<1x8x16xf32> to vector<8x16xf32>
    %cst = arith.constant dense<0.000000e+00> : vector<8x256xf32>
    %3 = tpu.matmul %2, %0, %cst {dimension_numbers = #tpu.dot_dimension_numbers<[1], [0], [0], [1], [0, 0, 1, 1], [], []>} : vector<8x16xf32>, vector<16x256xf32>, vector<8x256xf32> -> vector<8x256xf32>
    %c1 = arith.constant 1 : index
    %c0_4 = arith.constant 0 : index
    %c0_5 = arith.constant 0 : index
    %4 = vector.load %arg2[%c1, %c0_4, %c0_5] : memref<4x8x16xf32, #tpu.memory_space<vmem>>, vector<1x8x16xf32>
    %5 = vector.shape_cast %4 : vector<1x8x16xf32> to vector<8x16xf32>
    %cst_6 = arith.constant dense<0.000000e+00> : vector<8x256xf32>
    %6 = tpu.matmul %5, %0, %cst_6 {dimension_numbers = #tpu.dot_dimension_numbers<[1], [0], [0], [1], [0, 0, 1, 1], [], []>} : vector<8x16xf32>, vector<16x256xf32>, vector<8x256xf32> -> vector<8x256xf32>
    %7 = arith.maximumf %3, %6 : vector<8x256xf32>
    %c2 = arith.constant 2 : index
    %c0_7 = arith.constant 0 : index
    %c0_8 = arith.constant 0 : index
    %8 = vector.load %arg2[%c2, %c0_7, %c0_8] : memref<4x8x16xf32, #tpu.memory_space<vmem>>, vector<1x8x16xf32>
    %9 = vector.shape_cast %8 : vector<1x8x16xf32> to vector<8x16xf32>
    %cst_9 = arith.constant dense<0.000000e+00> : vector<8x256xf32>
    %10 = tpu.matmul %9, %0, %cst_9 {dimension_numbers = #tpu.dot_dimension_numbers<[1], [0], [0], [1], [0, 0, 1, 1], [], []>} : vector<8x16xf32>, vector<16x256xf32>, vector<8x256xf32> -> vector<8x256xf32>
    %11 = arith.maximumf %7, %10 : vector<8x256xf32>
    %c3 = arith.constant 3 : index
    %c0_10 = arith.constant 0 : index
    %c0_11 = arith.constant 0 : index
    %12 = vector.load %arg2[%c3, %c0_10, %c0_11] : memref<4x8x16xf32, #tpu.memory_space<vmem>>, vector<1x8x16xf32>
    %13 = vector.shape_cast %12 : vector<1x8x16xf32> to vector<8x16xf32>
    %cst_12 = arith.constant dense<0.000000e+00> : vector<8x256xf32>
    %14 = tpu.matmul %13, %0, %cst_12 {dimension_numbers = #tpu.dot_dimension_numbers<[1], [0], [0], [1], [0, 0, 1, 1], [], []>} : vector<8x16xf32>, vector<16x256xf32>, vector<8x256xf32> -> vector<8x256xf32>
    %15 = arith.maximumf %11, %14 : vector<8x256xf32>
    %c0_13 = arith.constant 0 : index
    %c0_14 = arith.constant 0 : index
    %16 = vector.load %arg3[%c0_13, %c0_14] : memref<8x1xf32, #tpu.memory_space<vmem>>, vector<8x1xf32>
    %17 = vector.broadcast %16 : vector<8x1xf32> to vector<8x256xf32>
    %18 = arith.addf %15, %17 : vector<8x256xf32>
    %cst_15 = arith.constant 0.000000e+00 : f32
    %19 = vector.broadcast %cst_15 : f32 to vector<8x256xf32>
    %20 = arith.maximumf %18, %19 : vector<8x256xf32>
    %c0_16 = arith.constant 0 : index
    %c0_17 = arith.constant 0 : index
    %21 = vector.load %arg4[%c0_16, %c0_17] : memref<8x256xf32, #tpu.memory_space<vmem>>, vector<8x256xf32>
    tpu.vector_store %arg4[%c0_16, %c0_17], %20 {strides = array<i32>} : memref<8x256xf32, #tpu.memory_space<vmem>>, vector<8x256xf32>,
    return
  }
  func.func @transform_0(%arg0: i32) -> (i32, i32) {
    %c0_i32 = arith.constant 0 : i32
    %c0_i32_0 = arith.constant 0 : i32
    return %c0_i32, %arg0 : i32, i32
  }
  func.func @transform_1(%arg0: i32) -> (i32, i32, i32) {
    %c0_i32 = arith.constant 0 : i32
    %c0_i32_0 = arith.constant 0 : i32
    %c0_i32_1 = arith.constant 0 : i32
    %c0_i32_2 = arith.constant 0 : i32
    return %c0_i32, %c0_i32_0, %c0_i32_1 : i32, i32, i32
  }
  func.func @transform_2(%arg0: i32) -> (i32, i32) {
    %c0_i32 = arith.constant 0 : i32
    %c0_i32_0 = arith.constant 0 : i32
    %c0_i32_1 = arith.constant 0 : i32
    return %c0_i32, %c0_i32_0 : i32, i32
  }
  func.func @transform_3(%arg0: i32) -> (i32, i32) {
    %c0_i32 = arith.constant 0 : i32
    %c0_i32_0 = arith.constant 0 : i32
    return %c0_i32, %arg0 : i32, i32
  }
}

module attributes {stable_mosaic.version = 11 : i64} {
  func.func @conv_relu_pool_kernel(%arg0: i32, %arg1: memref<128x128xf32, #tpu.memory_space<vmem>>, %arg2: memref<4x16x128xf32, #tpu.memory_space<vmem>>, %arg3: memref<16x1xf32, #tpu.memory_space<vmem>>, %arg4: memref<16x128xf32, #tpu.memory_space<vmem>>) attributes {dimension_semantics = [#tpu.dimension_semantics<parallel>], iteration_bounds = array<i64: 1>, scalar_prefetch = 0 : i64, scratch_operands = 0 : i64, tpu.core_type = #tpu.core_type<tc>, window_params = [{transform_indices = @transform_0, window_bounds = array<i64: 128, 128>}, {pipeline_mode = #tpu.pipeline_mode<synchronous>, transform_indices = @transform_1, window_bounds = array<i64: 4, 16, 128>}, {pipeline_mode = #tpu.pipeline_mode<synchronous>, transform_indices = @transform_2, window_bounds = array<i64: 16, 1>}, {transform_indices = @transform_3, window_bounds = array<i64: 16, 128>}]} {
    %c0 = arith.constant 0 : index
    %c0_0 = arith.constant 0 : index
    %0 = vector.load %arg1[%c0, %c0_0] : memref<128x128xf32, #tpu.memory_space<vmem>>, vector<128x128xf32>
    %c0_1 = arith.constant 0 : index
    %c0_2 = arith.constant 0 : index
    %c0_3 = arith.constant 0 : index
    %1 = vector.load %arg2[%c0_1, %c0_2, %c0_3] : memref<4x16x128xf32, #tpu.memory_space<vmem>>, vector<1x16x128xf32>
    %2 = vector.shape_cast %1 : vector<1x16x128xf32> to vector<16x128xf32>
    %cst = arith.constant dense<0.000000e+00> : vector<16x128xf32>
    %3 = tpu.matmul %2, %0, %cst {dimension_numbers = #tpu.dot_dimension_numbers<[1], [0], [0], [1], [0, 0, 1, 1], [], []>} : vector<16x128xf32>, vector<128x128xf32>, vector<16x128xf32> -> vector<16x128xf32>
    %c1 = arith.constant 1 : index
    %c0_4 = arith.constant 0 : index
    %c0_5 = arith.constant 0 : index
    %4 = vector.load %arg2[%c1, %c0_4, %c0_5] : memref<4x16x128xf32, #tpu.memory_space<vmem>>, vector<1x16x128xf32>
    %5 = vector.shape_cast %4 : vector<1x16x128xf32> to vector<16x128xf32>
    %cst_6 = arith.constant dense<0.000000e+00> : vector<16x128xf32>
    %6 = tpu.matmul %5, %0, %cst_6 {dimension_numbers = #tpu.dot_dimension_numbers<[1], [0], [0], [1], [0, 0, 1, 1], [], []>} : vector<16x128xf32>, vector<128x128xf32>, vector<16x128xf32> -> vector<16x128xf32>
    %7 = arith.maximumf %3, %6 : vector<16x128xf32>
    %c2 = arith.constant 2 : index
    %c0_7 = arith.constant 0 : index
    %c0_8 = arith.constant 0 : index
    %8 = vector.load %arg2[%c2, %c0_7, %c0_8] : memref<4x16x128xf32, #tpu.memory_space<vmem>>, vector<1x16x128xf32>
    %9 = vector.shape_cast %8 : vector<1x16x128xf32> to vector<16x128xf32>
    %cst_9 = arith.constant dense<0.000000e+00> : vector<16x128xf32>
    %10 = tpu.matmul %9, %0, %cst_9 {dimension_numbers = #tpu.dot_dimension_numbers<[1], [0], [0], [1], [0, 0, 1, 1], [], []>} : vector<16x128xf32>, vector<128x128xf32>, vector<16x128xf32> -> vector<16x128xf32>
    %11 = arith.maximumf %7, %10 : vector<16x128xf32>
    %c3 = arith.constant 3 : index
    %c0_10 = arith.constant 0 : index
    %c0_11 = arith.constant 0 : index
    %12 = vector.load %arg2[%c3, %c0_10, %c0_11] : memref<4x16x128xf32, #tpu.memory_space<vmem>>, vector<1x16x128xf32>
    %13 = vector.shape_cast %12 : vector<1x16x128xf32> to vector<16x128xf32>
    %cst_12 = arith.constant dense<0.000000e+00> : vector<16x128xf32>
    %14 = tpu.matmul %13, %0, %cst_12 {dimension_numbers = #tpu.dot_dimension_numbers<[1], [0], [0], [1], [0, 0, 1, 1], [], []>} : vector<16x128xf32>, vector<128x128xf32>, vector<16x128xf32> -> vector<16x128xf32>
    %15 = arith.maximumf %11, %14 : vector<16x128xf32>
    %c0_13 = arith.constant 0 : index
    %c0_14 = arith.constant 0 : index
    %16 = vector.load %arg3[%c0_13, %c0_14] : memref<16x1xf32, #tpu.memory_space<vmem>>, vector<16x1xf32>
    %17 = vector.broadcast %16 : vector<16x1xf32> to vector<16x128xf32>
    %18 = arith.addf %15, %17 : vector<16x128xf32>
    %cst_15 = arith.constant 0.000000e+00 : f32
    %19 = vector.broadcast %cst_15 : f32 to vector<16x128xf32>
    %20 = arith.maximumf %18, %19 : vector<16x128xf32>
    %c0_16 = arith.constant 0 : index
    %c0_17 = arith.constant 0 : index
    %21 = vector.load %arg4[%c0_16, %c0_17] : memref<16x128xf32, #tpu.memory_space<vmem>>, vector<16x128xf32>
    tpu.vector_store %arg4[%c0_16, %c0_17], %20 {strides = array<i32>} : memref<16x128xf32, #tpu.memory_space<vmem>>, vector<16x128xf32>,
    return
  }
  func.func @transform_0(%arg0: i32) -> (i32, i32) {
    %c0_i32 = arith.constant 0 : i32
    %c0_i32_0 = arith.constant 0 : i32
    return %c0_i32, %arg0 : i32, i32
  }
  func.func @transform_1(%arg0: i32) -> (i32, i32, i32) {
    %c0_i32 = arith.constant 0 : i32
    %c0_i32_0 = arith.constant 0 : i32
    %c0_i32_1 = arith.constant 0 : i32
    %c0_i32_2 = arith.constant 0 : i32
    return %c0_i32, %c0_i32_0, %c0_i32_1 : i32, i32, i32
  }
  func.func @transform_2(%arg0: i32) -> (i32, i32) {
    %c0_i32 = arith.constant 0 : i32
    %c0_i32_0 = arith.constant 0 : i32
    %c0_i32_1 = arith.constant 0 : i32
    return %c0_i32, %c0_i32_0 : i32, i32
  }
  func.func @transform_3(%arg0: i32) -> (i32, i32) {
    %c0_i32 = arith.constant 0 : i32
    %c0_i32_0 = arith.constant 0 : i32
    return %c0_i32, %arg0 : i32, i32
  }
}

module attributes {stable_mosaic.version = 11 : i64} {
  func.func @fc_stack_kernel(%arg0: i32, %arg1: memref<8x1024xf32, #tpu.memory_space<vmem>>, %arg2: memref<1024x128xf32, #tpu.memory_space<vmem>>, %arg3: memref<1x128xf32, #tpu.memory_space<vmem>>, %arg4: memref<128x128xf32, #tpu.memory_space<vmem>>, %arg5: memref<1x128xf32, #tpu.memory_space<vmem>>, %arg6: memref<128x128xf32, #tpu.memory_space<vmem>>, %arg7: memref<1x128xf32, #tpu.memory_space<vmem>>, %arg8: memref<8x128xf32, #tpu.memory_space<vmem>>) attributes {dimension_semantics = [#tpu.dimension_semantics<parallel>], iteration_bounds = array<i64: 1>, scalar_prefetch = 0 : i64, scratch_operands = 0 : i64, tpu.core_type = #tpu.core_type<tc>, window_params = [{transform_indices = @transform_0, window_bounds = array<i64: 8, 1024>}, {pipeline_mode = #tpu.pipeline_mode<synchronous>, transform_indices = @transform_1, window_bounds = array<i64: 1024, 128>}, {pipeline_mode = #tpu.pipeline_mode<synchronous>, transform_indices = @transform_2, window_bounds = array<i64: 1, 128>}, {pipeline_mode = #tpu.pipeline_mode<synchronous>, transform_indices = @transform_3, window_bounds = array<i64: 128, 128>}, {pipeline_mode = #tpu.pipeline_mode<synchronous>, transform_indices = @transform_4, window_bounds = array<i64: 1, 128>}, {pipeline_mode = #tpu.pipeline_mode<synchronous>, transform_indices = @transform_5, window_bounds = array<i64: 128, 128>}, {pipeline_mode = #tpu.pipeline_mode<synchronous>, transform_indices = @transform_6, window_bounds = array<i64: 1, 128>}, {transform_indices = @transform_7, window_bounds = array<i64: 8, 128>}]} {
    %c0 = arith.constant 0 : index
    %c0_0 = arith.constant 0 : index
    %0 = vector.load %arg1[%c0, %c0_0] : memref<8x1024xf32, #tpu.memory_space<vmem>>, vector<8x1024xf32>
    %c0_1 = arith.constant 0 : index
    %c0_2 = arith.constant 0 : index
    %1 = vector.load %arg2[%c0_1, %c0_2] : memref<1024x128xf32, #tpu.memory_space<vmem>>, vector<1024x128xf32>
    %cst = arith.constant dense<0.000000e+00> : vector<8x128xf32>
    %2 = tpu.matmul %0, %1, %cst {dimension_numbers = #tpu.dot_dimension_numbers<[1], [0], [0], [1], [0, 0, 1, 1], [], []>} : vector<8x1024xf32>, vector<1024x128xf32>, vector<8x128xf32> -> vector<8x128xf32>
    %c0_3 = arith.constant 0 : index
    %c0_4 = arith.constant 0 : index
    %3 = vector.load %arg3[%c0_3, %c0_4] : memref<1x128xf32, #tpu.memory_space<vmem>>, vector<1x128xf32>
    %4 = vector.broadcast %3 : vector<1x128xf32> to vector<8x128xf32>
    %5 = arith.addf %2, %4 : vector<8x128xf32>
    %cst_5 = arith.constant 0.000000e+00 : f32
    %6 = vector.broadcast %cst_5 : f32 to vector<8x128xf32>
    %7 = arith.maximumf %5, %6 : vector<8x128xf32>
    %c0_6 = arith.constant 0 : index
    %c0_7 = arith.constant 0 : index
    %8 = vector.load %arg4[%c0_6, %c0_7] : memref<128x128xf32, #tpu.memory_space<vmem>>, vector<128x128xf32>
    %cst_8 = arith.constant dense<0.000000e+00> : vector<8x128xf32>
    %9 = tpu.matmul %7, %8, %cst_8 {dimension_numbers = #tpu.dot_dimension_numbers<[1], [0], [0], [1], [0, 0, 1, 1], [], []>} : vector<8x128xf32>, vector<128x128xf32>, vector<8x128xf32> -> vector<8x128xf32>
    %c0_9 = arith.constant 0 : index
    %c0_10 = arith.constant 0 : index
    %10 = vector.load %arg5[%c0_9, %c0_10] : memref<1x128xf32, #tpu.memory_space<vmem>>, vector<1x128xf32>
    %11 = vector.broadcast %10 : vector<1x128xf32> to vector<8x128xf32>
    %12 = arith.addf %9, %11 : vector<8x128xf32>
    %cst_11 = arith.constant 0.000000e+00 : f32
    %13 = vector.broadcast %cst_11 : f32 to vector<8x128xf32>
    %14 = arith.maximumf %12, %13 : vector<8x128xf32>
    %c0_12 = arith.constant 0 : index
    %c0_13 = arith.constant 0 : index
    %15 = vector.load %arg6[%c0_12, %c0_13] : memref<128x128xf32, #tpu.memory_space<vmem>>, vector<128x128xf32>
    %cst_14 = arith.constant dense<0.000000e+00> : vector<8x128xf32>
    %16 = tpu.matmul %14, %15, %cst_14 {dimension_numbers = #tpu.dot_dimension_numbers<[1], [0], [0], [1], [0, 0, 1, 1], [], []>} : vector<8x128xf32>, vector<128x128xf32>, vector<8x128xf32> -> vector<8x128xf32>
    %c0_15 = arith.constant 0 : index
    %c0_16 = arith.constant 0 : index
    %17 = vector.load %arg7[%c0_15, %c0_16] : memref<1x128xf32, #tpu.memory_space<vmem>>, vector<1x128xf32>
    %18 = vector.broadcast %17 : vector<1x128xf32> to vector<8x128xf32>
    %19 = arith.addf %16, %18 : vector<8x128xf32>
    %c0_17 = arith.constant 0 : index
    %c0_18 = arith.constant 0 : index
    %20 = vector.load %arg8[%c0_17, %c0_18] : memref<8x128xf32, #tpu.memory_space<vmem>>, vector<8x128xf32>
    tpu.vector_store %arg8[%c0_17, %c0_18], %19 {strides = array<i32>} : memref<8x128xf32, #tpu.memory_space<vmem>>, vector<8x128xf32>,
    return
  }
  func.func @transform_0(%arg0: i32) -> (i32, i32) {
    %c0_i32 = arith.constant 0 : i32
    %c0_i32_0 = arith.constant 0 : i32
    return %arg0, %c0_i32 : i32, i32
  }
  func.func @transform_1(%arg0: i32) -> (i32, i32) {
    %c0_i32 = arith.constant 0 : i32
    %c0_i32_0 = arith.constant 0 : i32
    %c0_i32_1 = arith.constant 0 : i32
    return %c0_i32, %c0_i32_0 : i32, i32
  }
  func.func @transform_2(%arg0: i32) -> (i32, i32) {
    %c0_i32 = arith.constant 0 : i32
    %c0_i32_0 = arith.constant 0 : i32
    %c0_i32_1 = arith.constant 0 : i32
    return %c0_i32, %c0_i32_0 : i32, i32
  }
  func.func @transform_3(%arg0: i32) -> (i32, i32) {
    %c0_i32 = arith.constant 0 : i32
    %c0_i32_0 = arith.constant 0 : i32
    %c0_i32_1 = arith.constant 0 : i32
    return %c0_i32, %c0_i32_0 : i32, i32
  }
  func.func @transform_4(%arg0: i32) -> (i32, i32) {
    %c0_i32 = arith.constant 0 : i32
    %c0_i32_0 = arith.constant 0 : i32
    %c0_i32_1 = arith.constant 0 : i32
    return %c0_i32, %c0_i32_0 : i32, i32
  }
  func.func @transform_5(%arg0: i32) -> (i32, i32) {
    %c0_i32 = arith.constant 0 : i32
    %c0_i32_0 = arith.constant 0 : i32
    %c0_i32_1 = arith.constant 0 : i32
    return %c0_i32, %c0_i32_0 : i32, i32
  }
  func.func @transform_6(%arg0: i32) -> (i32, i32) {
    %c0_i32 = arith.constant 0 : i32
    %c0_i32_0 = arith.constant 0 : i32
    %c0_i32_1 = arith.constant 0 : i32
    return %c0_i32, %c0_i32_0 : i32, i32
  }
  func.func @transform_7(%arg0: i32) -> (i32, i32) {
    %c0_i32 = arith.constant 0 : i32
    %c0_i32_0 = arith.constant 0 : i32
    return %arg0, %c0_i32 : i32, i32
  }
}

</mosaic_0001>

<llo_original>
// kernel: symbolnet_forward.3
$region0: #{symbolnet_forward.3}
  #allocation0 [shape = 'u32[]', space=smem, size = 0x4, offset = 0x4, fixed_abs, tag = 'smem constant byte address 0x4 - core index']
  #allocation1 [shape = 'u32[144,128]{1,0:T(1,128)}', space=vmem, size = 0x12000, scoped, tag = 'internal scratch']
  %s0 = inlined_call_operand.vmem [shape: f32[16,512], index: 0, kind: input, shape index: {}]
  %s1 = inlined_call_operand.vmem [shape: f32[4,8,16], index: 1, kind: input, shape index: {}]
  %s2 = inlined_call_operand.vmem [shape: f32[8,1], index: 2, kind: input, shape index: {}]
  %s3 = inlined_call_operand.vmem [shape: f32[8,512], index: 3, kind: output, shape index: {}]
  %s4 = sld [smem:[#allocation0]]
  $region68: #{symbolnet_forward.3} parent=0
    _
  %s6 = ssub.s32 1, %s4
  %s7 = scalar_select 0, %s6, %s4
  $region1: #{symbolnet_forward.3} parent=0
    #allocation2 [shape = 'u8[32768]{0}', space=vmem, size = 0x8000, scoped, tag = 'input window, operand 0']
    loop: start=0, step=1, limit=4
    $region2: #{symbolnet_forward.3} parent=1 // loop_pre_header
      _
    $region3: #{symbolnet_forward.3} parent=1 // loop_header
      %s9 = sphi 0, %s13
      %p10 = scmp.ge.s32.totalorder %s9, 4
      %s19 = sphi 0, %s21
      %s22 = sphi 0, %s19
      %s23 = sphi 0, %s22
      %s39 = sphi 0, %s23
      %s43 = sphi 0, %s43
      %s45 = sphi 0, %s43
      %s46 = sphi 0, %s45
      %s60 = sphi 0, %s46
      %s64 = sphi 0, %s64
      %s66 = sphi 0, %s64
      %s67 = sphi 0, %s66
      %s81 = sphi 0, %s67
      %s87 = sphi 0, %s89
      %s90 = sphi 0, %s87
      %s91 = sphi 0, %s90
      %s107 = sphi 0, %s91
    $region4: #{symbolnet_forward.3} parent=1 // loop_header_branch
      %12 = sbr.rel (%p10) target = $region8
    $region5: #{symbolnet_forward.3} parent=1 // loop_body
      %s14 = ssub.s32 %s9, 1
      %s15 = ssub.s32 %s9, 2
      %s16 = sadd.s32 %s9, 1
      %s17 = ssub.s32 %s9, %s16
      %p18 = scmp.eq.s32.totalorder %s17, 0
      %s20 = sadd.s32 %s19, 1
      %s21 = scalar_select %p18, %s19, %s20
      %p24 = pneg %p18
      %p25 = scmp.eq.s32.totalorder %s9, 1
      %p26 = por %p24, %p25
      %p27 = scmp.ne.s32.totalorder %s19, %s22
      %p28 = scmp.eq.s32.totalorder %s9, 0
      %p29 = por %p27, %p28
      %p30 = scmp.ne.s32.totalorder %s19, %s22
      %p31 = scmp.eq.s32.totalorder %s14, 1
      %p32 = por %p30, %p31
      %p33 = scmp.ne.s32.totalorder %s22, %s23
      %p34 = scmp.eq.s32.totalorder %s14, 0
      %p35 = por %p33, %p34
      %p36 = scmp.ne.s32.totalorder %s22, %s23
      %p37 = scmp.eq.s32.totalorder %s15, 1
      %p38 = por %p36, %p37
      %p40 = scmp.ne.s32.totalorder %s23, %s39
      %p41 = scmp.eq.s32.totalorder %s15, 0
      %p42 = por %p40, %p41
      %s44 = sadd.s32 %s43, 1
      %p47 = scmp.eq.s32.totalorder %s9, 1
      %p48 = scmp.ne.s32.totalorder %s43, %s45
      %p49 = scmp.eq.s32.totalorder %s9, 0
      %p50 = por %p48, %p49
      %p51 = scmp.ne.s32.totalorder %s43, %s45
      %p52 = scmp.eq.s32.totalorder %s14, 1
      %p53 = por %p51, %p52
      %p54 = scmp.ne.s32.totalorder %s45, %s46
      %p55 = scmp.eq.s32.totalorder %s14, 0
      %p56 = por %p54, %p55
      %p57 = scmp.ne.s32.totalorder %s45, %s46
      %p58 = scmp.eq.s32.totalorder %s15, 1
      %p59 = por %p57, %p58
      %p61 = scmp.ne.s32.totalorder %s46, %s60
      %p62 = scmp.eq.s32.totalorder %s15, 0
      %p63 = por %p61, %p62
      %s65 = sadd.s32 %s64, 1
      %p68 = scmp.eq.s32.totalorder %s9, 1
      %p69 = scmp.ne.s32.totalorder %s64, %s66
      %p70 = scmp.eq.s32.totalorder %s9, 0
      %p71 = por %p69, %p70
      %p72 = scmp.ne.s32.totalorder %s64, %s66
      %p73 = scmp.eq.s32.totalorder %s14, 1
      %p74 = por %p72, %p73
      %p75 = scmp.ne.s32.totalorder %s66, %s67
      %p76 = scmp.eq.s32.totalorder %s14, 0
      %p77 = por %p75, %p76
      %p78 = scmp.ne.s32.totalorder %s66, %s67
      %p79 = scmp.eq.s32.totalorder %s15, 1
      %p80 = por %p78, %p79
      %p82 = scmp.ne.s32.totalorder %s67, %s81
      %p83 = scmp.eq.s32.totalorder %s15, 0
      %p84 = por %p82, %p83
      %s85 = ssub.s32 %s9, %s16
      %p86 = scmp.eq.s32.totalorder %s85, 0
      %s88 = sadd.s32 %s87, 1
      %s89 = scalar_select %p86, %s87, %s88
      %p92 = pneg %p86
      %p93 = scmp.eq.s32.totalorder %s9, 1
      %p94 = por %p92, %p93
      %p95 = scmp.ne.s32.totalorder %s87, %s90
      %p96 = scmp.eq.s32.totalorder %s9, 0
      %p97 = por %p95, %p96
      %p98 = scmp.ne.s32.totalorder %s87, %s90
      %p99 = scmp.eq.s32.totalorder %s14, 1
      %p100 = por %p98, %p99
      %p101 = scmp.ne.s32.totalorder %s90, %s91
      %p102 = scmp.eq.s32.totalorder %s14, 0
      %p103 = por %p101, %p102
      %p104 = scmp.ne.s32.totalorder %s90, %s91
      %p105 = scmp.eq.s32.totalorder %s15, 1
      %p106 = por %p104, %p105
      %p108 = scmp.ne.s32.totalorder %s91, %s107
      %p109 = scmp.eq.s32.totalorder %s15, 0
      %p110 = por %p108, %p109
      %p111 = scmp.le.s32.totalorder 1, %s9
      %p112 = scmp.lt.s32.totalorder %s9, 3
      %p113 = pnand %p111, %p112
      %p114 = pneg %p113
      // Predicated region
      $region9: #{symbolnet_forward.3} parent=5 // pred_check
        _
      $region10: #{symbolnet_forward.3} parent=5 // pred_check_branch
        %116 = sbr.rel (%p113) target = $region12
      $region11: #{symbolnet_forward.3} parent=5 // pred_region
        %s117 = ssub.s32 %s9, 1
        // Predicated region
        $region13: #{symbolnet_forward.3} parent=11 // pred_check
          %p118 = pneg %p56
        $region14: #{symbolnet_forward.3} parent=11 // pred_check_branch
          %120 = sbr.rel (%p118) target = $region16
        $region15: #{symbolnet_forward.3} parent=11 // pred_region
          _
        $region16: #{symbolnet_forward.3} parent=11 // pred_fallthru
          _
        // Predicated region
        $region17: #{symbolnet_forward.3} parent=11 // pred_check
          %p121 = pneg %p77
        $region18: #{symbolnet_forward.3} parent=11 // pred_check_branch
          %123 = sbr.rel (%p121) target = $region20
        $region19: #{symbolnet_forward.3} parent=11 // pred_region
          _
        $region20: #{symbolnet_forward.3} parent=11 // pred_fallthru
          _
      $region12: #{symbolnet_forward.3} parent=5 // pred_fallthru
        _
      %p124 = scmp.lt.s32.totalorder %s9, 2
      // Predicated region
      $region21: #{symbolnet_forward.3} parent=5 // pred_check
        %p125 = pneg %p124
      $region22: #{symbolnet_forward.3} parent=5 // pred_check_branch
        %127 = sbr.rel (%p125) target = $region24
      $region23: #{symbolnet_forward.3} parent=5 // pred_region
        // Predicated region
        $region25: #{symbolnet_forward.3} parent=23 // pred_check
          %p128 = pneg %p29
        $region26: #{symbolnet_forward.3} parent=23 // pred_check_branch
          %130 = sbr.rel (%p128) target = $region28
        $region27: #{symbolnet_forward.3} parent=23 // pred_region
          %s131 = sand.u32 %s19, 1
          %s132 = sand.u32 %s19, 1
          %s133 = smul.addr %s132, 32
          %s134 = scalar_lea.vmem [#allocation2], %s133
          %s135 = smul.u32 2, %s9
          %s136 = smul.addr %s135, 8
          %s137 = scalar_lea.vmem %s0, %s136
          // Predicated region
          $region29: #{symbolnet_forward.3} parent=27 // pred_check
            _
          $region30: #{symbolnet_forward.3} parent=27 // pred_check_branch
            %139 = sbr.rel (0) target = $region32
          $region31: #{symbolnet_forward.3} parent=27 // pred_region
            // Predicated region
            $region33: #{symbolnet_forward.3} parent=31 // pred_check
              _
            $region34: #{symbolnet_forward.3} parent=31 // pred_check_branch
              %141 = sbr.rel (0) target = $region36
            $region35: #{symbolnet_forward.3} parent=31 // pred_region
              loop: start=0, step=1, limit=1
              $region37: #{symbolnet_forward.3} parent=35 // loop_pre_header
                _
              $region38: #{symbolnet_forward.3} parent=35 // loop_header
                %s143 = sphi 0, %s147
                %p144 = scmp.ge.s32.totalorder %s143, 1
                %s148 = sphi %s137, %s137
                %s149 = sphi %s134, %s134
              $region39: #{symbolnet_forward.3} parent=35 // loop_header_branch
                %146 = sbr.rel (%p144) target = $region43
              $region40: #{symbolnet_forward.3} parent=35 // loop_body
                %v150 = vld [vmem:[%s148] sm:$0xff]
                %151 = vst [vmem:[%s149] sm:$0xff] %v150
                %v152 = vld [vmem:[%s148 + $0x8] sm:$0xff]
                %153 = vst [vmem:[%s149 + $0x8] sm:$0xff] %v152
                %v154 = vld [vmem:[%s148 + $0x20] sm:$0xff]
                %155 = vst [vmem:[%s149 + $0x10] sm:$0xff] %v154
                %v156 = vld [vmem:[%s148 + $0x28] sm:$0xff]
                %157 = vst [vmem:[%s149 + $0x18] sm:$0xff] %v156
              $region41: #{symbolnet_forward.3} parent=35 // loop_footer
                %s147 = sadd.s32 1, %s143
              $region42: #{symbolnet_forward.3} parent=35 // loop_footer_branch
                %142 = sbr.rel target = $region38
              $region43: #{symbolnet_forward.3} parent=35 // loop_exit
                _
            $region36: #{symbolnet_forward.3} parent=31 // pred_fallthru
              _
            // Predicated region
            $region44: #{symbolnet_forward.3} parent=31 // pred_check
              _
            $region45: #{symbolnet_forward.3} parent=31 // pred_check_branch
              %159 = sbr.rel target = $region47
            $region46: #{symbolnet_forward.3} parent=31 // pred_region
              _
            $region47: #{symbolnet_forward.3} parent=31 // pred_fallthru
              _
          $region32: #{symbolnet_forward.3} parent=27 // pred_fallthru
            _
          %160 = vnop
        $region28: #{symbolnet_forward.3} parent=23 // pred_fallthru
          _
      $region24: #{symbolnet_forward.3} parent=5 // pred_fallthru
        _
      %p161 = scmp.le.s32.totalorder 1, %s9
      %p162 = scmp.lt.s32.totalorder %s9, 3
      %p163 = pnand %p161, %p162
      %p164 = pneg %p163
      // Predicated region
      $region48: #{symbolnet_forward.3} parent=5 // pred_check
        _
      $region49: #{symbolnet_forward.3} parent=5 // pred_check_branch
        %166 = sbr.rel (%p163) target = $region51
      $region50: #{symbolnet_forward.3} parent=5 // pred_region
        %s167 = ssub.s32 %s9, 1
        %s168 = sand.u32 %s22, 1
        %s169 = sand.u32 %s22, 1
        %s170 = smul.addr %s169, 32
        %s171 = scalar_lea.vmem [#allocation2], %s170
        // Predicated region
        $region52: #{symbolnet_forward.3} parent=50 // pred_check
          %p172 = pneg %p35
        $region53: #{symbolnet_forward.3} parent=50 // pred_check_branch
          %174 = sbr.rel (%p172) target = $region55
        $region54: #{symbolnet_forward.3} parent=50 // pred_region
          _
        $region55: #{symbolnet_forward.3} parent=50 // pred_fallthru
          _
        %s175 = sand.u32 %s22, 1
        %s176 = sand.u32 %s22, 1
        %s177 = smul.addr %s176, 32
        %s178 = scalar_lea.vmem [#allocation2], %s177
        %p179 = pneg %p35
        %p180 = pneg %p32
        %p181 = pneg %p56
        %p182 = pneg %p53
        %p183 = pneg %p77
        %p184 = pneg %p74
        %p185 = pneg %p103
        %p186 = pneg %p100
        %s187 = smul.u32 2, %s14
        %p188 = scmp.lt.s32.totalorder %s187, 3
        %s189 = scalar_select %p188, %s187, 3
        %s190 = smul.addr %s189, 8
        %s191 = scalar_lea.vmem %s3, %s190
        %s192 = smul.u32 2, %s14
        %s193 = smul.u32 2, %s14
        %p194 = scmp.lt.s32.totalorder %s193, 3
        %s195 = scalar_select %p194, %s193, 3
        %s196 = smul.addr %s195, 8
        %s197 = scalar_lea.vmem %s3, %s196
        %s198 = smul.u32 2, %s14
        %v199 = vld [vmem:[%s171] sm:$0xff]
        %v200 = vld [vmem:[%s171 + $0x8] sm:$0xff]
        %v201 = vld [vmem:[%s171 + $0x10] sm:$0xff]
        %v202 = vld [vmem:[%s171 + $0x18] sm:$0xff]
        %v203 = vld [vmem:[%s1] sm:$0xff]
        %vm204 = vcmask 130048
        %v206 = vsel %vm204, %v203, 0
        %208 = vmatprep.subr.mxu0 %v200
        %209 = vmatpush1.msra.mxu0 %v199
        %210 = vmatprep.subr.mxu0 %v202
        %211 = vmatpush1.msra.mxu0 %v201
        %212 = vmatprep.subr.mxu0 0.0
        %213 = vmatpush1.msra.mxu0 0.0
        %214 = vmatprep.subr.mxu0 0.0
        %215 = vmatpush1.msra.mxu0 0.0
        %216 = vmatprep.subr.mxu0 0.0
        %217 = vmatpush1.msra.mxu0 0.0
        %218 = vmatprep.subr.mxu0 0.0
        %219 = vmatpush1.msra.mxu0 0.0
        %220 = vmatprep.subr.mxu0 0.0
        %221 = vmatpush1.msra.mxu0 0.0
        %222 = vmatprep.subr.mxu0 0.0
        %223 = vmatpush1.msra.mxu0 0.0
        %224 = vmatprep.subr.mxu0 0.0
        %225 = vmatpush1.msra.mxu0 0.0
        %226 = vmatprep.subr.mxu0 0.0
        %227 = vmatpush1.msra.mxu0 0.0
        %228 = vmatprep.subr.mxu0 0.0
        %229 = vmatpush1.msra.mxu0 0.0
        %230 = vmatprep.subr.mxu0 0.0
        %231 = vmatpush1.msra.mxu0 0.0
        %232 = vmatprep.subr.mxu0 0.0
        %233 = vmatpush1.msra.mxu0 0.0
        %234 = vmatprep.subr.mxu0 0.0
        %235 = vmatpush1.msra.mxu0 0.0
        %236 = vmatprep.subr.mxu0 0.0
        %237 = vmatpush1.msra.mxu0 0.0
        %238 = vmatprep.subr.mxu0 0.0
        %239 = vmatpush1.msra.mxu0 0.0
        %240 = vmatprep.subr.mxu0 0.0
        %241 = vmatpush1.msra.mxu0 0.0
        %242 = vmatprep.subr.mxu0 0.0
        %243 = vmatpush1.msra.mxu0 0.0
        %244 = vmatprep.subr.mxu0 0.0
        %245 = vmatpush1.msra.mxu0 0.0
        %246 = vmatprep.subr.mxu0 0.0
        %247 = vmatpush1.msra.mxu0 0.0
        %248 = vmatprep.subr.mxu0 0.0
        %249 = vmatpush1.msra.mxu0 0.0
        %250 = vmatprep.subr.mxu0 0.0
        %251 = vmatpush1.msra.mxu0 0.0
        %252 = vmatprep.subr.mxu0 0.0
        %253 = vmatpush1.msra.mxu0 0.0
        %254 = vmatprep.subr.mxu0 0.0
        %255 = vmatpush1.msra.mxu0 0.0
        %256 = vmatprep.subr.mxu0 0.0
        %257 = vmatpush1.msra.mxu0 0.0
        %258 = vmatprep.subr.mxu0 0.0
        %259 = vmatpush1.msra.mxu0 0.0
        %260 = vmatprep.subr.mxu0 0.0
        %261 = vmatpush1.msra.mxu0 0.0
        %262 = vmatprep.subr.mxu0 0.0
        %263 = vmatpush1.msra.mxu0 0.0
        %264 = vmatprep.subr.mxu0 0.0
        %265 = vmatpush1.msra.mxu0 0.0
        %266 = vmatprep.subr.mxu0 0.0
        %267 = vmatpush1.msra.mxu0 0.0
        %268 = vmatprep.subr.mxu0 0.0
        %269 = vmatpush1.msra.mxu0 0.0
        %270 = vmatprep.subr.mxu0 0.0
        %271 = vmatpush1.msra.mxu0 0.0
        %272 = vmatprep.mubr.f32.mxu0 0.0
        %273 = vmatmul.mubr.f32.gmra.mrb[0].mxu0 %v206
        %v274 = vpop.f32.mrb[0].mxu0
        %v275 = vadd.f32 0.0, %v274
        %v276 = vpop.f32.mrb[0].mxu0
        %v277 = vadd.f32 0.0, %v276
        %278 = vdwg.mxu0
        %s279 = scalar_lea.vmem %s1, 8
        %v280 = vld [vmem:[%s279] sm:$0xff]
        %v282 = vsel %vm204, %v280, 0
        %284 = vmatprep.subr.mxu0 %v200
        %285 = vmatpush1.msra.mxu0 %v199
        %286 = vmatprep.subr.mxu0 %v202
        %287 = vmatpush1.msra.mxu0 %v201
        %288 = vmatprep.subr.mxu0 0.0
        %289 = vmatpush1.msra.mxu0 0.0
        %290 = vmatprep.subr.mxu0 0.0
        %291 = vmatpush1.msra.mxu0 0.0
        %292 = vmatprep.subr.mxu0 0.0
        %293 = vmatpush1.msra.mxu0 0.0
        %294 = vmatprep.subr.mxu0 0.0
        %295 = vmatpush1.msra.mxu0 0.0
        %296 = vmatprep.subr.mxu0 0.0
        %297 = vmatpush1.msra.mxu0 0.0
        %298 = vmatprep.subr.mxu0 0.0
        %299 = vmatpush1.msra.mxu0 0.0
        %300 = vmatprep.subr.mxu0 0.0
        %301 = vmatpush1.msra.mxu0 0.0
        %302 = vmatprep.subr.mxu0 0.0
        %303 = vmatpush1.msra.mxu0 0.0
        %304 = vmatprep.subr.mxu0 0.0
        %305 = vmatpush1.msra.mxu0 0.0
        %306 = vmatprep.subr.mxu0 0.0
        %307 = vmatpush1.msra.mxu0 0.0
        %308 = vmatprep.subr.mxu0 0.0
        %309 = vmatpush1.msra.mxu0 0.0
        %310 = vmatprep.subr.mxu0 0.0
        %311 = vmatpush1.msra.mxu0 0.0
        %312 = vmatprep.subr.mxu0 0.0
        %313 = vmatpush1.msra.mxu0 0.0
        %314 = vmatprep.subr.mxu0 0.0
        %315 = vmatpush1.msra.mxu0 0.0
        %316 = vmatprep.subr.mxu0 0.0
        %317 = vmatpush1.msra.mxu0 0.0
        %318 = vmatprep.subr.mxu0 0.0
        %319 = vmatpush1.msra.mxu0 0.0
        %320 = vmatprep.subr.mxu0 0.0
        %321 = vmatpush1.msra.mxu0 0.0
        %322 = vmatprep.subr.mxu0 0.0
        %323 = vmatpush1.msra.mxu0 0.0
        %324 = vmatprep.subr.mxu0 0.0
        %325 = vmatpush1.msra.mxu0 0.0
        %326 = vmatprep.subr.mxu0 0.0
        %327 = vmatpush1.msra.mxu0 0.0
        %328 = vmatprep.subr.mxu0 0.0
        %329 = vmatpush1.msra.mxu0 0.0
        %330 = vmatprep.subr.mxu0 0.0
        %331 = vmatpush1.msra.mxu0 0.0
        %332 = vmatprep.subr.mxu0 0.0
        %333 = vmatpush1.msra.mxu0 0.0
        %334 = vmatprep.subr.mxu0 0.0
        %335 = vmatpush1.msra.mxu0 0.0
        %336 = vmatprep.subr.mxu0 0.0
        %337 = vmatpush1.msra.mxu0 0.0
        %338 = vmatprep.subr.mxu0 0.0
        %339 = vmatpush1.msra.mxu0 0.0
        %340 = vmatprep.subr.mxu0 0.0
        %341 = vmatpush1.msra.mxu0 0.0
        %342 = vmatprep.subr.mxu0 0.0
        %343 = vmatpush1.msra.mxu0 0.0
        %344 = vmatprep.subr.mxu0 0.0
        %345 = vmatpush1.msra.mxu0 0.0
        %346 = vmatprep.subr.mxu0 0.0
        %347 = vmatpush1.msra.mxu0 0.0
        %348 = vmatprep.mubr.f32.mxu0 0.0
        %349 = vmatmul.mubr.f32.gmra.mrb[0].mxu0 %v282
        %v350 = vpop.f32.mrb[0].mxu0
        %v351 = vadd.f32 0.0, %v350
        %v352 = vpop.f32.mrb[0].mxu0
        %v353 = vadd.f32 0.0, %v352
        %354 = vdwg.mxu0
        %v355 = vmax.f32 %v275, %v351
        %v356 = vmax.f32 %v277, %v353
        %s357 = scalar_lea.vmem %s1, 16
        %v358 = vld [vmem:[%s357] sm:$0xff]
        %v360 = vsel %vm204, %v358, 0
        %362 = vmatprep.subr.mxu0 %v200
        %363 = vmatpush1.msra.mxu0 %v199
        %364 = vmatprep.subr.mxu0 %v202
        %365 = vmatpush1.msra.mxu0 %v201
        %366 = vmatprep.subr.mxu0 0.0
        %367 = vmatpush1.msra.mxu0 0.0
        %368 = vmatprep.subr.mxu0 0.0
        %369 = vmatpush1.msra.mxu0 0.0
        %370 = vmatprep.subr.mxu0 0.0
        %371 = vmatpush1.msra.mxu0 0.0
        %372 = vmatprep.subr.mxu0 0.0
        %373 = vmatpush1.msra.mxu0 0.0
        %374 = vmatprep.subr.mxu0 0.0
        %375 = vmatpush1.msra.mxu0 0.0
        %376 = vmatprep.subr.mxu0 0.0
        %377 = vmatpush1.msra.mxu0 0.0
        %378 = vmatprep.subr.mxu0 0.0
        %379 = vmatpush1.msra.mxu0 0.0
        %380 = vmatprep.subr.mxu0 0.0
        %381 = vmatpush1.msra.mxu0 0.0
        %382 = vmatprep.subr.mxu0 0.0
        %383 = vmatpush1.msra.mxu0 0.0
        %384 = vmatprep.subr.mxu0 0.0
        %385 = vmatpush1.msra.mxu0 0.0
        %386 = vmatprep.subr.mxu0 0.0
        %387 = vmatpush1.msra.mxu0 0.0
        %388 = vmatprep.subr.mxu0 0.0
        %389 = vmatpush1.msra.mxu0 0.0
        %390 = vmatprep.subr.mxu0 0.0
        %391 = vmatpush1.msra.mxu0 0.0
        %392 = vmatprep.subr.mxu0 0.0
        %393 = vmatpush1.msra.mxu0 0.0
        %394 = vmatprep.subr.mxu0 0.0
        %395 = vmatpush1.msra.mxu0 0.0
        %396 = vmatprep.subr.mxu0 0.0
        %397 = vmatpush1.msra.mxu0 0.0
        %398 = vmatprep.subr.mxu0 0.0
        %399 = vmatpush1.msra.mxu0 0.0
        %400 = vmatprep.subr.mxu0 0.0
        %401 = vmatpush1.msra.mxu0 0.0
        %402 = vmatprep.subr.mxu0 0.0
        %403 = vmatpush1.msra.mxu0 0.0
        %404 = vmatprep.subr.mxu0 0.0
        %405 = vmatpush1.msra.mxu0 0.0
        %406 = vmatprep.subr.mxu0 0.0
        %407 = vmatpush1.msra.mxu0 0.0
        %408 = vmatprep.subr.mxu0 0.0
        %409 = vmatpush1.msra.mxu0 0.0
        %410 = vmatprep.subr.mxu0 0.0
        %411 = vmatpush1.msra.mxu0 0.0
        %412 = vmatprep.subr.mxu0 0.0
        %413 = vmatpush1.msra.mxu0 0.0
        %414 = vmatprep.subr.mxu0 0.0
        %415 = vmatpush1.msra.mxu0 0.0
        %416 = vmatprep.subr.mxu0 0.0
        %417 = vmatpush1.msra.mxu0 0.0
        %418 = vmatprep.subr.mxu0 0.0
        %419 = vmatpush1.msra.mxu0 0.0
        %420 = vmatprep.subr.mxu0 0.0
        %421 = vmatpush1.msra.mxu0 0.0
        %422 = vmatprep.subr.mxu0 0.0
        %423 = vmatpush1.msra.mxu0 0.0
        %424 = vmatprep.subr.mxu0 0.0
        %425 = vmatpush1.msra.mxu0 0.0
        %426 = vmatprep.mubr.f32.mxu0 0.0
        %427 = vmatmul.mubr.f32.gmra.mrb[0].mxu0 %v360
        %v428 = vpop.f32.mrb[0].mxu0
        %v429 = vadd.f32 0.0, %v428
        %v430 = vpop.f32.mrb[0].mxu0
        %v431 = vadd.f32 0.0, %v430
        %432 = vdwg.mxu0
        %v433 = vmax.f32 %v355, %v429
        %v434 = vmax.f32 %v356, %v431
        %s435 = scalar_lea.vmem %s1, 24
        %v436 = vld [vmem:[%s435] sm:$0xff]
        %v438 = vsel %vm204, %v436, 0
        %440 = vmatprep.subr.mxu0 %v200
        %441 = vmatpush1.msra.mxu0 %v199
        %442 = vmatprep.subr.mxu0 %v202
        %443 = vmatpush1.msra.mxu0 %v201
        %444 = vmatprep.subr.mxu0 0.0
        %445 = vmatpush1.msra.mxu0 0.0
        %446 = vmatprep.subr.mxu0 0.0
        %447 = vmatpush1.msra.mxu0 0.0
        %448 = vmatprep.subr.mxu0 0.0
        %449 = vmatpush1.msra.mxu0 0.0
        %450 = vmatprep.subr.mxu0 0.0
        %451 = vmatpush1.msra.mxu0 0.0
        %452 = vmatprep.subr.mxu0 0.0
        %453 = vmatpush1.msra.mxu0 0.0
        %454 = vmatprep.subr.mxu0 0.0
        %455 = vmatpush1.msra.mxu0 0.0
        %456 = vmatprep.subr.mxu0 0.0
        %457 = vmatpush1.msra.mxu0 0.0
        %458 = vmatprep.subr.mxu0 0.0
        %459 = vmatpush1.msra.mxu0 0.0
        %460 = vmatprep.subr.mxu0 0.0
        %461 = vmatpush1.msra.mxu0 0.0
        %462 = vmatprep.subr.mxu0 0.0
        %463 = vmatpush1.msra.mxu0 0.0
        %464 = vmatprep.subr.mxu0 0.0
        %465 = vmatpush1.msra.mxu0 0.0
        %466 = vmatprep.subr.mxu0 0.0
        %467 = vmatpush1.msra.mxu0 0.0
        %468 = vmatprep.subr.mxu0 0.0
        %469 = vmatpush1.msra.mxu0 0.0
        %470 = vmatprep.subr.mxu0 0.0
        %471 = vmatpush1.msra.mxu0 0.0
        %472 = vmatprep.subr.mxu0 0.0
        %473 = vmatpush1.msra.mxu0 0.0
        %474 = vmatprep.subr.mxu0 0.0
        %475 = vmatpush1.msra.mxu0 0.0
        %476 = vmatprep.subr.mxu0 0.0
        %477 = vmatpush1.msra.mxu0 0.0
        %478 = vmatprep.subr.mxu0 0.0
        %479 = vmatpush1.msra.mxu0 0.0
        %480 = vmatprep.subr.mxu0 0.0
        %481 = vmatpush1.msra.mxu0 0.0
        %482 = vmatprep.subr.mxu0 0.0
        %483 = vmatpush1.msra.mxu0 0.0
        %484 = vmatprep.subr.mxu0 0.0
        %485 = vmatpush1.msra.mxu0 0.0
        %486 = vmatprep.subr.mxu0 0.0
        %487 = vmatpush1.msra.mxu0 0.0
        %488 = vmatprep.subr.mxu0 0.0
        %489 = vmatpush1.msra.mxu0 0.0
        %490 = vmatprep.subr.mxu0 0.0
        %491 = vmatpush1.msra.mxu0 0.0
        %492 = vmatprep.subr.mxu0 0.0
        %493 = vmatpush1.msra.mxu0 0.0
        %494 = vmatprep.subr.mxu0 0.0
        %495 = vmatpush1.msra.mxu0 0.0
        %496 = vmatprep.subr.mxu0 0.0
        %497 = vmatpush1.msra.mxu0 0.0
        %498 = vmatprep.subr.mxu0 0.0
        %499 = vmatpush1.msra.mxu0 0.0
        %500 = vmatprep.subr.mxu0 0.0
        %501 = vmatpush1.msra.mxu0 0.0
        %502 = vmatprep.subr.mxu0 0.0
        %503 = vmatpush1.msra.mxu0 0.0
        %504 = vmatprep.mubr.f32.mxu0 0.0
        %505 = vmatmul.mubr.f32.gmra.mrb[0].mxu0 %v438
        %v506 = vpop.f32.mrb[0].mxu0
        %v507 = vadd.f32 0.0, %v506
        %v508 = vpop.f32.mrb[0].mxu0
        %v509 = vadd.f32 0.0, %v508
        %510 = vdwg.mxu0
        %v511 = vmax.f32 %v433, %v507
        %v512 = vmax.f32 %v434, %v509
        %v513 = vld [vmem:[%s2] sm:$0xff]
        %515 = vset.pattern.permute.xlu0 0
        %516 = vperm.xlu0 %515, %v513
        %v517 = vpop.permute.xlu0 %516
        %v519 = vadd.f32 %v511, %v517
        %v520 = vadd.f32 %v512, %v517
        %v521 = vmax.f32 %v519, 0.0
        %v522 = vmax.f32 %v520, 0.0
        %523 = vst [vmem:[%s197] sm:$0xff] %v521
        %524 = vst [vmem:[%s197 + $0x8] sm:$0xff] %v522
        %s525 = smul.u32 2, %s14
        %p526 = scmp.lt.s32.totalorder %s525, 3
        %s527 = scalar_select %p526, %s525, 3
        %s528 = smul.addr %s527, 8
        %s529 = scalar_lea.vmem %s3, %s528
        // Predicated region
        $region56: #{symbolnet_forward.3} parent=50 // pred_check
          %p530 = pneg %p100
        $region57: #{symbolnet_forward.3} parent=50 // pred_check_branch
          %532 = sbr.rel (%p530) target = $region59
        $region58: #{symbolnet_forward.3} parent=50 // pred_region
          %s533 = smul.u32 2, %s14
        $region59: #{symbolnet_forward.3} parent=50 // pred_fallthru
          _
      $region51: #{symbolnet_forward.3} parent=5 // pred_fallthru
        _
      %p534 = scmp.le.s32.totalorder 2, %s9
      // Predicated region
      $region60: #{symbolnet_forward.3} parent=5 // pred_check
        %p535 = pneg %p534
      $region61: #{symbolnet_forward.3} parent=5 // pred_check_branch
        %537 = sbr.rel (%p535) target = $region63
      $region62: #{symbolnet_forward.3} parent=5 // pred_region
        %s538 = ssub.s32 %s9, 2
        // Predicated region
        $region64: #{symbolnet_forward.3} parent=62 // pred_check
          %p539 = pneg %p106
        $region65: #{symbolnet_forward.3} parent=62 // pred_check_branch
          %541 = sbr.rel (%p539) target = $region67
        $region66: #{symbolnet_forward.3} parent=62 // pred_region
          %s542 = smul.u32 2, %s15
          %p543 = scmp.lt.s32.totalorder %s542, 3
          %s544 = scalar_select %p543, %s542, 3
          %s545 = smul.addr %s544, 8
          %s546 = scalar_lea.vmem %s3, %s545
        $region67: #{symbolnet_forward.3} parent=62 // pred_fallthru
          _
      $region63: #{symbolnet_forward.3} parent=5 // pred_fallthru
        _
    $region6: #{symbolnet_forward.3} parent=1 // loop_footer
      %s13 = sadd.s32 1, %s9
    $region7: #{symbolnet_forward.3} parent=1 // loop_footer_branch
      %8 = sbr.rel target = $region3
    $region8: #{symbolnet_forward.3} parent=1 // loop_exit
      _

// kernel: symbolnet_forward.4
$region0: #{symbolnet_forward.4}
  #allocation0 [shape = 'u32[]', space=smem, size = 0x4, offset = 0x4, fixed_abs, tag = 'smem constant byte address 0x4 - core index']
  #allocation1 [shape = 'u32[144,128]{1,0:T(1,128)}', space=vmem, size = 0x12000, scoped, tag = 'internal scratch']
  %s0 = inlined_call_operand.vmem [shape: f32[128,128], index: 0, kind: input, shape index: {}]
  %s1 = inlined_call_operand.vmem [shape: f32[4,16,128], index: 1, kind: input, shape index: {}]
  %s2 = inlined_call_operand.vmem [shape: f32[16,1], index: 2, kind: input, shape index: {}]
  %s3 = inlined_call_operand.vmem [shape: f32[16,128], index: 3, kind: output, shape index: {}]
  %s4 = sld [smem:[#allocation0]]
  $region22: #{symbolnet_forward.4} parent=0
    _
  %s6 = ssub.s32 1, %s4
  %s7 = scalar_select 0, %s6, %s4
  // Predicated region
  $region2: #{symbolnet_forward.4} parent=0 // pred_check
    _
  $region3: #{symbolnet_forward.4} parent=0 // pred_check_branch
    %9 = sbr.rel (0) target = $region5
  $region4: #{symbolnet_forward.4} parent=0 // pred_region
    _
  $region5: #{symbolnet_forward.4} parent=0 // pred_fallthru
    _
  // Predicated region
  $region6: #{symbolnet_forward.4} parent=0 // pred_check
    _
  $region7: #{symbolnet_forward.4} parent=0 // pred_check_branch
    %11 = sbr.rel (0) target = $region9
  $region8: #{symbolnet_forward.4} parent=0 // pred_region
    _
  $region9: #{symbolnet_forward.4} parent=0 // pred_fallthru
    _
  // Predicated region
  $region10: #{symbolnet_forward.4} parent=0 // pred_check
    _
  $region11: #{symbolnet_forward.4} parent=0 // pred_check_branch
    %13 = sbr.rel (0) target = $region13
  $region12: #{symbolnet_forward.4} parent=0 // pred_region
    _
  $region13: #{symbolnet_forward.4} parent=0 // pred_fallthru
    _
  %v14 = vld [vmem:[%s0] sm:$0xff]
  %v15 = vld [vmem:[%s0 + $0x8] sm:$0xff]
  %v16 = vld [vmem:[%s0 + $0x10] sm:$0xff]
  %v17 = vld [vmem:[%s0 + $0x18] sm:$0xff]
  %v18 = vld [vmem:[%s0 + $0x20] sm:$0xff]
  %v19 = vld [vmem:[%s0 + $0x28] sm:$0xff]
  %v20 = vld [vmem:[%s0 + $0x30] sm:$0xff]
  %v21 = vld [vmem:[%s0 + $0x38] sm:$0xff]
  %v22 = vld [vmem:[%s0 + $0x40] sm:$0xff]
  %v23 = vld [vmem:[%s0 + $0x48] sm:$0xff]
  %v24 = vld [vmem:[%s0 + $0x50] sm:$0xff]
  %v25 = vld [vmem:[%s0 + $0x58] sm:$0xff]
  %v26 = vld [vmem:[%s0 + $0x60] sm:$0xff]
  %v27 = vld [vmem:[%s0 + $0x68] sm:$0xff]
  %v28 = vld [vmem:[%s0 + $0x70] sm:$0xff]
  %v29 = vld [vmem:[%s0 + $0x78] sm:$0xff]
  %v30 = vld [vmem:[%s1] sm:$0xff]
  %v31 = vld [vmem:[%s1 + $0x8] sm:$0xff]
  %32 = vmatprep.subr.mxu0 0.0
  %33 = vmatpush1.msra.mxu0 %v14
  %34 = vmatprep.subr.mxu0 0.0
  %35 = vmatpush1.msra.mxu0 %v15
  %36 = vmatprep.subr.mxu0 0.0
  %37 = vmatpush1.msra.mxu0 %v16
  %38 = vmatprep.subr.mxu0 0.0
  %39 = vmatpush1.msra.mxu0 %v17
  %40 = vmatprep.subr.mxu0 0.0
  %41 = vmatpush1.msra.mxu0 %v18
  %42 = vmatprep.subr.mxu0 0.0
  %43 = vmatpush1.msra.mxu0 %v19
  %44 = vmatprep.subr.mxu0 0.0
  %45 = vmatpush1.msra.mxu0 %v20
  %46 = vmatprep.subr.mxu0 0.0
  %47 = vmatpush1.msra.mxu0 %v21
  %48 = vmatprep.subr.mxu0 0.0
  %49 = vmatpush1.msra.mxu0 %v22
  %50 = vmatprep.subr.mxu0 0.0
  %51 = vmatpush1.msra.mxu0 %v23
  %52 = vmatprep.subr.mxu0 0.0
  %53 = vmatpush1.msra.mxu0 %v24
  %54 = vmatprep.subr.mxu0 0.0
  %55 = vmatpush1.msra.mxu0 %v25
  %56 = vmatprep.subr.mxu0 0.0
  %57 = vmatpush1.msra.mxu0 %v26
  %58 = vmatprep.subr.mxu0 0.0
  %59 = vmatpush1.msra.mxu0 %v27
  %60 = vmatprep.subr.mxu0 0.0
  %61 = vmatpush1.msra.mxu0 %v28
  %62 = vmatprep.subr.mxu0 0.0
  %63 = vmatpush1.msra.mxu0 %v29
  %64 = vmatprep.subr.mxu0 0.0
  %65 = vmatpush1.msra.mxu0 0.0
  %66 = vmatprep.subr.mxu0 0.0
  %67 = vmatpush1.msra.mxu0 0.0
  %68 = vmatprep.subr.mxu0 0.0
  %69 = vmatpush1.msra.mxu0 0.0
  %70 = vmatprep.subr.mxu0 0.0
  %71 = vmatpush1.msra.mxu0 0.0
  %72 = vmatprep.subr.mxu0 0.0
  %73 = vmatpush1.msra.mxu0 0.0
  %74 = vmatprep.subr.mxu0 0.0
  %75 = vmatpush1.msra.mxu0 0.0
  %76 = vmatprep.subr.mxu0 0.0
  %77 = vmatpush1.msra.mxu0 0.0
  %78 = vmatprep.subr.mxu0 0.0
  %79 = vmatpush1.msra.mxu0 0.0
  %80 = vmatprep.subr.mxu0 0.0
  %81 = vmatpush1.msra.mxu0 0.0
  %82 = vmatprep.subr.mxu0 0.0
  %83 = vmatpush1.msra.mxu0 0.0
  %84 = vmatprep.subr.mxu0 0.0
  %85 = vmatpush1.msra.mxu0 0.0
  %86 = vmatprep.subr.mxu0 0.0
  %87 = vmatpush1.msra.mxu0 0.0
  %88 = vmatprep.subr.mxu0 0.0
  %89 = vmatpush1.msra.mxu0 0.0
  %90 = vmatprep.subr.mxu0 0.0
  %91 = vmatpush1.msra.mxu0 0.0
  %92 = vmatprep.subr.mxu0 0.0
  %93 = vmatpush1.msra.mxu0 0.0
  %94 = vmatprep.subr.mxu0 0.0
  %95 = vmatpush1.msra.mxu0 0.0
  %96 = vmatprep.mubr.f32.mxu0 0.0
  %97 = vmatmul.mubr.f32.gmra.mrb[0].mxu0 %v30
  %v98 = vpop.f32.mrb[0].mxu0
  %v99 = vadd.f32 0.0, %v98
  %v100 = vpop.f32.mrb[0].mxu0
  %101 = vmatprep.mubr.f32.mxu0 0.0
  %102 = vmatmul.mubr.f32.gmra.mrb[0].mxu0 %v31
  %v103 = vpop.f32.mrb[0].mxu0
  %v104 = vadd.f32 0.0, %v103
  %v105 = vpop.f32.mrb[0].mxu0
  %106 = vdwg.mxu0
  %s107 = scalar_lea.vmem %s1, 16
  %v108 = vld [vmem:[%s107] sm:$0xff]
  %v109 = vld [vmem:[%s107 + $0x8] sm:$0xff]
  %110 = vmatprep.subr.mxu0 0.0
  %111 = vmatpush1.msra.mxu0 %v14
  %112 = vmatprep.subr.mxu0 0.0
  %113 = vmatpush1.msra.mxu0 %v15
  %114 = vmatprep.subr.mxu0 0.0
  %115 = vmatpush1.msra.mxu0 %v16
  %116 = vmatprep.subr.mxu0 0.0
  %117 = vmatpush1.msra.mxu0 %v17
  %118 = vmatprep.subr.mxu0 0.0
  %119 = vmatpush1.msra.mxu0 %v18
  %120 = vmatprep.subr.mxu0 0.0
  %121 = vmatpush1.msra.mxu0 %v19
  %122 = vmatprep.subr.mxu0 0.0
  %123 = vmatpush1.msra.mxu0 %v20
  %124 = vmatprep.subr.mxu0 0.0
  %125 = vmatpush1.msra.mxu0 %v21
  %126 = vmatprep.subr.mxu0 0.0
  %127 = vmatpush1.msra.mxu0 %v22
  %128 = vmatprep.subr.mxu0 0.0
  %129 = vmatpush1.msra.mxu0 %v23
  %130 = vmatprep.subr.mxu0 0.0
  %131 = vmatpush1.msra.mxu0 %v24
  %132 = vmatprep.subr.mxu0 0.0
  %133 = vmatpush1.msra.mxu0 %v25
  %134 = vmatprep.subr.mxu0 0.0
  %135 = vmatpush1.msra.mxu0 %v26
  %136 = vmatprep.subr.mxu0 0.0
  %137 = vmatpush1.msra.mxu0 %v27
  %138 = vmatprep.subr.mxu0 0.0
  %139 = vmatpush1.msra.mxu0 %v28
  %140 = vmatprep.subr.mxu0 0.0
  %141 = vmatpush1.msra.mxu0 %v29
  %142 = vmatprep.subr.mxu0 0.0
  %143 = vmatpush1.msra.mxu0 0.0
  %144 = vmatprep.subr.mxu0 0.0
  %145 = vmatpush1.msra.mxu0 0.0
  %146 = vmatprep.subr.mxu0 0.0
  %147 = vmatpush1.msra.mxu0 0.0
  %148 = vmatprep.subr.mxu0 0.0
  %149 = vmatpush1.msra.mxu0 0.0
  %150 = vmatprep.subr.mxu0 0.0
  %151 = vmatpush1.msra.mxu0 0.0
  %152 = vmatprep.subr.mxu0 0.0
  %153 = vmatpush1.msra.mxu0 0.0
  %154 = vmatprep.subr.mxu0 0.0
  %155 = vmatpush1.msra.mxu0 0.0
  %156 = vmatprep.subr.mxu0 0.0
  %157 = vmatpush1.msra.mxu0 0.0
  %158 = vmatprep.subr.mxu0 0.0
  %159 = vmatpush1.msra.mxu0 0.0
  %160 = vmatprep.subr.mxu0 0.0
  %161 = vmatpush1.msra.mxu0 0.0
  %162 = vmatprep.subr.mxu0 0.0
  %163 = vmatpush1.msra.mxu0 0.0
  %164 = vmatprep.subr.mxu0 0.0
  %165 = vmatpush1.msra.mxu0 0.0
  %166 = vmatprep.subr.mxu0 0.0
  %167 = vmatpush1.msra.mxu0 0.0
  %168 = vmatprep.subr.mxu0 0.0
  %169 = vmatpush1.msra.mxu0 0.0
  %170 = vmatprep.subr.mxu0 0.0
  %171 = vmatpush1.msra.mxu0 0.0
  %172 = vmatprep.subr.mxu0 0.0
  %173 = vmatpush1.msra.mxu0 0.0
  %174 = vmatprep.mubr.f32.mxu0 0.0
  %175 = vmatmul.mubr.f32.gmra.mrb[0].mxu0 %v108
  %v176 = vpop.f32.mrb[0].mxu0
  %v177 = vadd.f32 0.0, %v176
  %v178 = vpop.f32.mrb[0].mxu0
  %179 = vmatprep.mubr.f32.mxu0 0.0
  %180 = vmatmul.mubr.f32.gmra.mrb[0].mxu0 %v109
  %v181 = vpop.f32.mrb[0].mxu0
  %v182 = vadd.f32 0.0, %v181
  %v183 = vpop.f32.mrb[0].mxu0
  %184 = vdwg.mxu0
  %v185 = vmax.f32 %v99, %v177
  %v186 = vmax.f32 %v104, %v182
  %s187 = scalar_lea.vmem %s1, 32
  %v188 = vld [vmem:[%s187] sm:$0xff]
  %v189 = vld [vmem:[%s187 + $0x8] sm:$0xff]
  %190 = vmatprep.subr.mxu0 0.0
  %191 = vmatpush1.msra.mxu0 %v14
  %192 = vmatprep.subr.mxu0 0.0
  %193 = vmatpush1.msra.mxu0 %v15
  %194 = vmatprep.subr.mxu0 0.0
  %195 = vmatpush1.msra.mxu0 %v16
  %196 = vmatprep.subr.mxu0 0.0
  %197 = vmatpush1.msra.mxu0 %v17
  %198 = vmatprep.subr.mxu0 0.0
  %199 = vmatpush1.msra.mxu0 %v18
  %200 = vmatprep.subr.mxu0 0.0
  %201 = vmatpush1.msra.mxu0 %v19
  %202 = vmatprep.subr.mxu0 0.0
  %203 = vmatpush1.msra.mxu0 %v20
  %204 = vmatprep.subr.mxu0 0.0
  %205 = vmatpush1.msra.mxu0 %v21
  %206 = vmatprep.subr.mxu0 0.0
  %207 = vmatpush1.msra.mxu0 %v22
  %208 = vmatprep.subr.mxu0 0.0
  %209 = vmatpush1.msra.mxu0 %v23
  %210 = vmatprep.subr.mxu0 0.0
  %211 = vmatpush1.msra.mxu0 %v24
  %212 = vmatprep.subr.mxu0 0.0
  %213 = vmatpush1.msra.mxu0 %v25
  %214 = vmatprep.subr.mxu0 0.0
  %215 = vmatpush1.msra.mxu0 %v26
  %216 = vmatprep.subr.mxu0 0.0
  %217 = vmatpush1.msra.mxu0 %v27
  %218 = vmatprep.subr.mxu0 0.0
  %219 = vmatpush1.msra.mxu0 %v28
  %220 = vmatprep.subr.mxu0 0.0
  %221 = vmatpush1.msra.mxu0 %v29
  %222 = vmatprep.subr.mxu0 0.0
  %223 = vmatpush1.msra.mxu0 0.0
  %224 = vmatprep.subr.mxu0 0.0
  %225 = vmatpush1.msra.mxu0 0.0
  %226 = vmatprep.subr.mxu0 0.0
  %227 = vmatpush1.msra.mxu0 0.0
  %228 = vmatprep.subr.mxu0 0.0
  %229 = vmatpush1.msra.mxu0 0.0
  %230 = vmatprep.subr.mxu0 0.0
  %231 = vmatpush1.msra.mxu0 0.0
  %232 = vmatprep.subr.mxu0 0.0
  %233 = vmatpush1.msra.mxu0 0.0
  %234 = vmatprep.subr.mxu0 0.0
  %235 = vmatpush1.msra.mxu0 0.0
  %236 = vmatprep.subr.mxu0 0.0
  %237 = vmatpush1.msra.mxu0 0.0
  %238 = vmatprep.subr.mxu0 0.0
  %239 = vmatpush1.msra.mxu0 0.0
  %240 = vmatprep.subr.mxu0 0.0
  %241 = vmatpush1.msra.mxu0 0.0
  %242 = vmatprep.subr.mxu0 0.0
  %243 = vmatpush1.msra.mxu0 0.0
  %244 = vmatprep.subr.mxu0 0.0
  %245 = vmatpush1.msra.mxu0 0.0
  %246 = vmatprep.subr.mxu0 0.0
  %247 = vmatpush1.msra.mxu0 0.0
  %248 = vmatprep.subr.mxu0 0.0
  %249 = vmatpush1.msra.mxu0 0.0
  %250 = vmatprep.subr.mxu0 0.0
  %251 = vmatpush1.msra.mxu0 0.0
  %252 = vmatprep.subr.mxu0 0.0
  %253 = vmatpush1.msra.mxu0 0.0
  %254 = vmatprep.mubr.f32.mxu0 0.0
  %255 = vmatmul.mubr.f32.gmra.mrb[0].mxu0 %v188
  %v256 = vpop.f32.mrb[0].mxu0
  %v257 = vadd.f32 0.0, %v256
  %v258 = vpop.f32.mrb[0].mxu0
  %259 = vmatprep.mubr.f32.mxu0 0.0
  %260 = vmatmul.mubr.f32.gmra.mrb[0].mxu0 %v189
  %v261 = vpop.f32.mrb[0].mxu0
  %v262 = vadd.f32 0.0, %v261
  %v263 = vpop.f32.mrb[0].mxu0
  %264 = vdwg.mxu0
  %v265 = vmax.f32 %v185, %v257
  %v266 = vmax.f32 %v186, %v262
  %s267 = scalar_lea.vmem %s1, 48
  %v268 = vld [vmem:[%s267] sm:$0xff]
  %v269 = vld [vmem:[%s267 + $0x8] sm:$0xff]
  %270 = vmatprep.subr.mxu0 0.0
  %271 = vmatpush1.msra.mxu0 %v14
  %272 = vmatprep.subr.mxu0 0.0
  %273 = vmatpush1.msra.mxu0 %v15
  %274 = vmatprep.subr.mxu0 0.0
  %275 = vmatpush1.msra.mxu0 %v16
  %276 = vmatprep.subr.mxu0 0.0
  %277 = vmatpush1.msra.mxu0 %v17
  %278 = vmatprep.subr.mxu0 0.0
  %279 = vmatpush1.msra.mxu0 %v18
  %280 = vmatprep.subr.mxu0 0.0
  %281 = vmatpush1.msra.mxu0 %v19
  %282 = vmatprep.subr.mxu0 0.0
  %283 = vmatpush1.msra.mxu0 %v20
  %284 = vmatprep.subr.mxu0 0.0
  %285 = vmatpush1.msra.mxu0 %v21
  %286 = vmatprep.subr.mxu0 0.0
  %287 = vmatpush1.msra.mxu0 %v22
  %288 = vmatprep.subr.mxu0 0.0
  %289 = vmatpush1.msra.mxu0 %v23
  %290 = vmatprep.subr.mxu0 0.0
  %291 = vmatpush1.msra.mxu0 %v24
  %292 = vmatprep.subr.mxu0 0.0
  %293 = vmatpush1.msra.mxu0 %v25
  %294 = vmatprep.subr.mxu0 0.0
  %295 = vmatpush1.msra.mxu0 %v26
  %296 = vmatprep.subr.mxu0 0.0
  %297 = vmatpush1.msra.mxu0 %v27
  %298 = vmatprep.subr.mxu0 0.0
  %299 = vmatpush1.msra.mxu0 %v28
  %300 = vmatprep.subr.mxu0 0.0
  %301 = vmatpush1.msra.mxu0 %v29
  %302 = vmatprep.subr.mxu0 0.0
  %303 = vmatpush1.msra.mxu0 0.0
  %304 = vmatprep.subr.mxu0 0.0
  %305 = vmatpush1.msra.mxu0 0.0
  %306 = vmatprep.subr.mxu0 0.0
  %307 = vmatpush1.msra.mxu0 0.0
  %308 = vmatprep.subr.mxu0 0.0
  %309 = vmatpush1.msra.mxu0 0.0
  %310 = vmatprep.subr.mxu0 0.0
  %311 = vmatpush1.msra.mxu0 0.0
  %312 = vmatprep.subr.mxu0 0.0
  %313 = vmatpush1.msra.mxu0 0.0
  %314 = vmatprep.subr.mxu0 0.0
  %315 = vmatpush1.msra.mxu0 0.0
  %316 = vmatprep.subr.mxu0 0.0
  %317 = vmatpush1.msra.mxu0 0.0
  %318 = vmatprep.subr.mxu0 0.0
  %319 = vmatpush1.msra.mxu0 0.0
  %320 = vmatprep.subr.mxu0 0.0
  %321 = vmatpush1.msra.mxu0 0.0
  %322 = vmatprep.subr.mxu0 0.0
  %323 = vmatpush1.msra.mxu0 0.0
  %324 = vmatprep.subr.mxu0 0.0
  %325 = vmatpush1.msra.mxu0 0.0
  %326 = vmatprep.subr.mxu0 0.0
  %327 = vmatpush1.msra.mxu0 0.0
  %328 = vmatprep.subr.mxu0 0.0
  %329 = vmatpush1.msra.mxu0 0.0
  %330 = vmatprep.subr.mxu0 0.0
  %331 = vmatpush1.msra.mxu0 0.0
  %332 = vmatprep.subr.mxu0 0.0
  %333 = vmatpush1.msra.mxu0 0.0
  %334 = vmatprep.mubr.f32.mxu0 0.0
  %335 = vmatmul.mubr.f32.gmra.mrb[0].mxu0 %v268
  %v336 = vpop.f32.mrb[0].mxu0
  %v337 = vadd.f32 0.0, %v336
  %v338 = vpop.f32.mrb[0].mxu0
  %339 = vmatprep.mubr.f32.mxu0 0.0
  %340 = vmatmul.mubr.f32.gmra.mrb[0].mxu0 %v269
  %v341 = vpop.f32.mrb[0].mxu0
  %v342 = vadd.f32 0.0, %v341
  %v343 = vpop.f32.mrb[0].mxu0
  %344 = vdwg.mxu0
  %v345 = vmax.f32 %v265, %v337
  %v346 = vmax.f32 %v266, %v342
  %v347 = vld [vmem:[%s2] sm:$0xff]
  %v348 = vld [vmem:[%s2 + $0x8] sm:$0xff]
  %350 = vset.pattern.permute.xlu0 0
  %351 = vperm.xlu0 %350, %v347
  %v352 = vpop.permute.xlu0 %351
  %355 = vset.pattern.permute.xlu0 0
  %356 = vperm.xlu0 %355, %v348
  %v357 = vpop.permute.xlu0 %356
  %v359 = vadd.f32 %v345, %v352
  %v360 = vadd.f32 %v346, %v357
  %v361 = vmax.f32 %v359, 0.0
  %v362 = vmax.f32 %v360, 0.0
  %363 = vst [vmem:[%s3] sm:$0xff] %v361
  %364 = vst [vmem:[%s3 + $0x8] sm:$0xff] %v362
  // Predicated region
  $region14: #{symbolnet_forward.4} parent=0 // pred_check
    _
  $region15: #{symbolnet_forward.4} parent=0 // pred_check_branch
    %366 = sbr.rel (0) target = $region17
  $region16: #{symbolnet_forward.4} parent=0 // pred_region
    _
  $region17: #{symbolnet_forward.4} parent=0 // pred_fallthru
    _
  // Predicated region
  $region18: #{symbolnet_forward.4} parent=0 // pred_check
    _
  $region19: #{symbolnet_forward.4} parent=0 // pred_check_branch
    %368 = sbr.rel (0) target = $region21
  $region20: #{symbolnet_forward.4} parent=0 // pred_region
    _
  $region21: #{symbolnet_forward.4} parent=0 // pred_fallthru
    _

// kernel: symbolnet_forward.5
$region0: #{symbolnet_forward.5}
  #allocation0 [shape = 'u32[]', space=smem, size = 0x4, offset = 0x4, fixed_abs, tag = 'smem constant byte address 0x4 - core index']
  #allocation1 [shape = 'u32[144,128]{1,0:T(1,128)}', space=vmem, size = 0x12000, scoped, tag = 'internal scratch']
  %s0 = inlined_call_operand.vmem [shape: f32[8,1024], index: 0, kind: input, shape index: {}]
  %s1 = inlined_call_operand.vmem [shape: f32[1024,128], index: 1, kind: input, shape index: {}]
  %s2 = inlined_call_operand.vmem [shape: f32[1,128], index: 2, kind: input, shape index: {}]
  %s3 = inlined_call_operand.vmem [shape: f32[128,128], index: 3, kind: input, shape index: {}]
  %s4 = inlined_call_operand.vmem [shape: f32[1,128], index: 4, kind: input, shape index: {}]
  %s5 = inlined_call_operand.vmem [shape: f32[128,128], index: 5, kind: input, shape index: {}]
  %s6 = inlined_call_operand.vmem [shape: f32[1,128], index: 6, kind: input, shape index: {}]
  %s7 = inlined_call_operand.vmem [shape: f32[8,128], index: 7, kind: output, shape index: {}]
  %s8 = sld [smem:[#allocation0]]
  $region38: #{symbolnet_forward.5} parent=0
    _
  %s10 = ssub.s32 1, %s8
  %s11 = scalar_select 0, %s10, %s8
  // Predicated region
  $region2: #{symbolnet_forward.5} parent=0 // pred_check
    _
  $region3: #{symbolnet_forward.5} parent=0 // pred_check_branch
    %13 = sbr.rel (0) target = $region5
  $region4: #{symbolnet_forward.5} parent=0 // pred_region
    _
  $region5: #{symbolnet_forward.5} parent=0 // pred_fallthru
    _
  // Predicated region
  $region6: #{symbolnet_forward.5} parent=0 // pred_check
    _
  $region7: #{symbolnet_forward.5} parent=0 // pred_check_branch
    %15 = sbr.rel (0) target = $region9
  $region8: #{symbolnet_forward.5} parent=0 // pred_region
    _
  $region9: #{symbolnet_forward.5} parent=0 // pred_fallthru
    _
  // Predicated region
  $region10: #{symbolnet_forward.5} parent=0 // pred_check
    _
  $region11: #{symbolnet_forward.5} parent=0 // pred_check_branch
    %17 = sbr.rel (0) target = $region13
  $region12: #{symbolnet_forward.5} parent=0 // pred_region
    _
  $region13: #{symbolnet_forward.5} parent=0 // pred_fallthru
    _
  // Predicated region
  $region14: #{symbolnet_forward.5} parent=0 // pred_check
    _
  $region15: #{symbolnet_forward.5} parent=0 // pred_check_branch
    %19 = sbr.rel (0) target = $region17
  $region16: #{symbolnet_forward.5} parent=0 // pred_region
    _
  $region17: #{symbolnet_forward.5} parent=0 // pred_fallthru
    _
  // Predicated region
  $region18: #{symbolnet_forward.5} parent=0 // pred_check
    _
  $region19: #{symbolnet_forward.5} parent=0 // pred_check_branch
    %21 = sbr.rel (0) target = $region21
  $region20: #{symbolnet_forward.5} parent=0 // pred_region
    _
  $region21: #{symbolnet_forward.5} parent=0 // pred_fallthru
    _
  // Predicated region
  $region22: #{symbolnet_forward.5} parent=0 // pred_check
    _
  $region23: #{symbolnet_forward.5} parent=0 // pred_check_branch
    %23 = sbr.rel (0) target = $region25
  $region24: #{symbolnet_forward.5} parent=0 // pred_region
    _
  $region25: #{symbolnet_forward.5} parent=0 // pred_fallthru
    _
  // Predicated region
  $region26: #{symbolnet_forward.5} parent=0 // pred_check
    _
  $region27: #{symbolnet_forward.5} parent=0 // pred_check_branch
    %25 = sbr.rel (0) target = $region29
  $region28: #{symbolnet_forward.5} parent=0 // pred_region
    _
  $region29: #{symbolnet_forward.5} parent=0 // pred_fallthru
    _
  %v26 = vld [vmem:[%s0] sm:$0xff]
  %v27 = vld [vmem:[%s0 + $0x8] sm:$0xff]
  %v28 = vld [vmem:[%s0 + $0x10] sm:$0xff]
  %v29 = vld [vmem:[%s0 + $0x18] sm:$0xff]
  %v30 = vld [vmem:[%s0 + $0x20] sm:$0xff]
  %v31 = vld [vmem:[%s0 + $0x28] sm:$0xff]
  %v32 = vld [vmem:[%s0 + $0x30] sm:$0xff]
  %v33 = vld [vmem:[%s0 + $0x38] sm:$0xff]
  %v34 = vld [vmem:[%s1] sm:$0xff]
  %v35 = vld [vmem:[%s1 + $0x8] sm:$0xff]
  %v36 = vld [vmem:[%s1 + $0x10] sm:$0xff]
  %v37 = vld [vmem:[%s1 + $0x18] sm:$0xff]
  %v38 = vld [vmem:[%s1 + $0x20] sm:$0xff]
  %v39 = vld [vmem:[%s1 + $0x28] sm:$0xff]
  %v40 = vld [vmem:[%s1 + $0x30] sm:$0xff]
  %v41 = vld [vmem:[%s1 + $0x38] sm:$0xff]
  %v42 = vld [vmem:[%s1 + $0x40] sm:$0xff]
  %v43 = vld [vmem:[%s1 + $0x48] sm:$0xff]
  %v44 = vld [vmem:[%s1 + $0x50] sm:$0xff]
  %v45 = vld [vmem:[%s1 + $0x58] sm:$0xff]
  %v46 = vld [vmem:[%s1 + $0x60] sm:$0xff]
  %v47 = vld [vmem:[%s1 + $0x68] sm:$0xff]
  %v48 = vld [vmem:[%s1 + $0x70] sm:$0xff]
  %v49 = vld [vmem:[%s1 + $0x78] sm:$0xff]
  %v50 = vld [vmem:[%s1 + $0x80] sm:$0xff]
  %v51 = vld [vmem:[%s1 + $0x88] sm:$0xff]
  %v52 = vld [vmem:[%s1 + $0x90] sm:$0xff]
  %v53 = vld [vmem:[%s1 + $0x98] sm:$0xff]
  %v54 = vld [vmem:[%s1 + $0xa0] sm:$0xff]
  %v55 = vld [vmem:[%s1 + $0xa8] sm:$0xff]
  %v56 = vld [vmem:[%s1 + $0xb0] sm:$0xff]
  %v57 = vld [vmem:[%s1 + $0xb8] sm:$0xff]
  %v58 = vld [vmem:[%s1 + $0xc0] sm:$0xff]
  %v59 = vld [vmem:[%s1 + $0xc8] sm:$0xff]
  %v60 = vld [vmem:[%s1 + $0xd0] sm:$0xff]
  %v61 = vld [vmem:[%s1 + $0xd8] sm:$0xff]
  %v62 = vld [vmem:[%s1 + $0xe0] sm:$0xff]
  %v63 = vld [vmem:[%s1 + $0xe8] sm:$0xff]
  %v64 = vld [vmem:[%s1 + $0xf0] sm:$0xff]
  %v65 = vld [vmem:[%s1 + $0xf8] sm:$0xff]
  %v66 = vld [vmem:[%s1 + $0x100] sm:$0xff]
  %v67 = vld [vmem:[%s1 + $0x108] sm:$0xff]
  %v68 = vld [vmem:[%s1 + $0x110] sm:$0xff]
  %v69 = vld [vmem:[%s1 + $0x118] sm:$0xff]
  %v70 = vld [vmem:[%s1 + $0x120] sm:$0xff]
  %v71 = vld [vmem:[%s1 + $0x128] sm:$0xff]
  %v72 = vld [vmem:[%s1 + $0x130] sm:$0xff]
  %v73 = vld [vmem:[%s1 + $0x138] sm:$0xff]
  %v74 = vld [vmem:[%s1 + $0x140] sm:$0xff]
  %v75 = vld [vmem:[%s1 + $0x148] sm:$0xff]
  %v76 = vld [vmem:[%s1 + $0x150] sm:$0xff]
  %v77 = vld [vmem:[%s1 + $0x158] sm:$0xff]
  %v78 = vld [vmem:[%s1 + $0x160] sm:$0xff]
  %v79 = vld [vmem:[%s1 + $0x168] sm:$0xff]
  %v80 = vld [vmem:[%s1 + $0x170] sm:$0xff]
  %v81 = vld [vmem:[%s1 + $0x178] sm:$0xff]
  %v82 = vld [vmem:[%s1 + $0x180] sm:$0xff]
  %v83 = vld [vmem:[%s1 + $0x188] sm:$0xff]
  %v84 = vld [vmem:[%s1 + $0x190] sm:$0xff]
  %v85 = vld [vmem:[%s1 + $0x198] sm:$0xff]
  %v86 = vld [vmem:[%s1 + $0x1a0] sm:$0xff]
  %v87 = vld [vmem:[%s1 + $0x1a8] sm:$0xff]
  %v88 = vld [vmem:[%s1 + $0x1b0] sm:$0xff]
  %v89 = vld [vmem:[%s1 + $0x1b8] sm:$0xff]
  %v90 = vld [vmem:[%s1 + $0x1c0] sm:$0xff]
  %v91 = vld [vmem:[%s1 + $0x1c8] sm:$0xff]
  %v92 = vld [vmem:[%s1 + $0x1d0] sm:$0xff]
  %v93 = vld [vmem:[%s1 + $0x1d8] sm:$0xff]
  %v94 = vld [vmem:[%s1 + $0x1e0] sm:$0xff]
  %v95 = vld [vmem:[%s1 + $0x1e8] sm:$0xff]
  %v96 = vld [vmem:[%s1 + $0x1f0] sm:$0xff]
  %v97 = vld [vmem:[%s1 + $0x1f8] sm:$0xff]
  %v98 = vld [vmem:[%s1 + $0x200] sm:$0xff]
  %v99 = vld [vmem:[%s1 + $0x208] sm:$0xff]
  %v100 = vld [vmem:[%s1 + $0x210] sm:$0xff]
  %v101 = vld [vmem:[%s1 + $0x218] sm:$0xff]
  %v102 = vld [vmem:[%s1 + $0x220] sm:$0xff]
  %v103 = vld [vmem:[%s1 + $0x228] sm:$0xff]
  %v104 = vld [vmem:[%s1 + $0x230] sm:$0xff]
  %v105 = vld [vmem:[%s1 + $0x238] sm:$0xff]
  %v106 = vld [vmem:[%s1 + $0x240] sm:$0xff]
  %v107 = vld [vmem:[%s1 + $0x248] sm:$0xff]
  %v108 = vld [vmem:[%s1 + $0x250] sm:$0xff]
  %v109 = vld [vmem:[%s1 + $0x258] sm:$0xff]
  %v110 = vld [vmem:[%s1 + $0x260] sm:$0xff]
  %v111 = vld [vmem:[%s1 + $0x268] sm:$0xff]
  %v112 = vld [vmem:[%s1 + $0x270] sm:$0xff]
  %v113 = vld [vmem:[%s1 + $0x278] sm:$0xff]
  %v114 = vld [vmem:[%s1 + $0x280] sm:$0xff]
  %v115 = vld [vmem:[%s1 + $0x288] sm:$0xff]
  %v116 = vld [vmem:[%s1 + $0x290] sm:$0xff]
  %v117 = vld [vmem:[%s1 + $0x298] sm:$0xff]
  %v118 = vld [vmem:[%s1 + $0x2a0] sm:$0xff]
  %v119 = vld [vmem:[%s1 + $0x2a8] sm:$0xff]
  %v120 = vld [vmem:[%s1 + $0x2b0] sm:$0xff]
  %v121 = vld [vmem:[%s1 + $0x2b8] sm:$0xff]
  %v122 = vld [vmem:[%s1 + $0x2c0] sm:$0xff]
  %v123 = vld [vmem:[%s1 + $0x2c8] sm:$0xff]
  %v124 = vld [vmem:[%s1 + $0x2d0] sm:$0xff]
  %v125 = vld [vmem:[%s1 + $0x2d8] sm:$0xff]
  %v126 = vld [vmem:[%s1 + $0x2e0] sm:$0xff]
  %v127 = vld [vmem:[%s1 + $0x2e8] sm:$0xff]
  %v128 = vld [vmem:[%s1 + $0x2f0] sm:$0xff]
  %v129 = vld [vmem:[%s1 + $0x2f8] sm:$0xff]
  %v130 = vld [vmem:[%s1 + $0x300] sm:$0xff]
  %v131 = vld [vmem:[%s1 + $0x308] sm:$0xff]
  %v132 = vld [vmem:[%s1 + $0x310] sm:$0xff]
  %v133 = vld [vmem:[%s1 + $0x318] sm:$0xff]
  %v134 = vld [vmem:[%s1 + $0x320] sm:$0xff]
  %v135 = vld [vmem:[%s1 + $0x328] sm:$0xff]
  %v136 = vld [vmem:[%s1 + $0x330] sm:$0xff]
  %v137 = vld [vmem:[%s1 + $0x338] sm:$0xff]
  %v138 = vld [vmem:[%s1 + $0x340] sm:$0xff]
  %v139 = vld [vmem:[%s1 + $0x348] sm:$0xff]
  %v140 = vld [vmem:[%s1 + $0x350] sm:$0xff]
  %v141 = vld [vmem:[%s1 + $0x358] sm:$0xff]
  %v142 = vld [vmem:[%s1 + $0x360] sm:$0xff]
  %v143 = vld [vmem:[%s1 + $0x368] sm:$0xff]
  %v144 = vld [vmem:[%s1 + $0x370] sm:$0xff]
  %v145 = vld [vmem:[%s1 + $0x378] sm:$0xff]
  %v146 = vld [vmem:[%s1 + $0x380] sm:$0xff]
  %v147 = vld [vmem:[%s1 + $0x388] sm:$0xff]
  %v148 = vld [vmem:[%s1 + $0x390] sm:$0xff]
  %v149 = vld [vmem:[%s1 + $0x398] sm:$0xff]
  %v150 = vld [vmem:[%s1 + $0x3a0] sm:$0xff]
  %v151 = vld [vmem:[%s1 + $0x3a8] sm:$0xff]
  %v152 = vld [vmem:[%s1 + $0x3b0] sm:$0xff]
  %v153 = vld [vmem:[%s1 + $0x3b8] sm:$0xff]
  %v154 = vld [vmem:[%s1 + $0x3c0] sm:$0xff]
  %v155 = vld [vmem:[%s1 + $0x3c8] sm:$0xff]
  %v156 = vld [vmem:[%s1 + $0x3d0] sm:$0xff]
  %v157 = vld [vmem:[%s1 + $0x3d8] sm:$0xff]
  %v158 = vld [vmem:[%s1 + $0x3e0] sm:$0xff]
  %v159 = vld [vmem:[%s1 + $0x3e8] sm:$0xff]
  %v160 = vld [vmem:[%s1 + $0x3f0] sm:$0xff]
  %v161 = vld [vmem:[%s1 + $0x3f8] sm:$0xff]
  %v162 = vld [vmem:[%s2] sm:$0x1]
  %v164 = vlaneseq
  %v165 = vshrl.u32 %v164, 7
  %v166 = vsub.s32 0, %v165
  %v167 = vrot.slane %v162, %v166
  %169 = vmatprep.subr.mxu0 0.0
  %170 = vmatpush1.msra.mxu0 %v34
  %171 = vmatprep.subr.mxu0 0.0
  %172 = vmatpush1.msra.mxu0 %v35
  %173 = vmatprep.subr.mxu0 0.0
  %174 = vmatpush1.msra.mxu0 %v36
  %175 = vmatprep.subr.mxu0 0.0
  %176 = vmatpush1.msra.mxu0 %v37
  %177 = vmatprep.subr.mxu0 0.0
  %178 = vmatpush1.msra.mxu0 %v38
  %179 = vmatprep.subr.mxu0 0.0
  %180 = vmatpush1.msra.mxu0 %v39
  %181 = vmatprep.subr.mxu0 0.0
  %182 = vmatpush1.msra.mxu0 %v40
  %183 = vmatprep.subr.mxu0 0.0
  %184 = vmatpush1.msra.mxu0 %v41
  %185 = vmatprep.subr.mxu0 0.0
  %186 = vmatpush1.msra.mxu0 %v42
  %187 = vmatprep.subr.mxu0 0.0
  %188 = vmatpush1.msra.mxu0 %v43
  %189 = vmatprep.subr.mxu0 0.0
  %190 = vmatpush1.msra.mxu0 %v44
  %191 = vmatprep.subr.mxu0 0.0
  %192 = vmatpush1.msra.mxu0 %v45
  %193 = vmatprep.subr.mxu0 0.0
  %194 = vmatpush1.msra.mxu0 %v46
  %195 = vmatprep.subr.mxu0 0.0
  %196 = vmatpush1.msra.mxu0 %v47
  %197 = vmatprep.subr.mxu0 0.0
  %198 = vmatpush1.msra.mxu0 %v48
  %199 = vmatprep.subr.mxu0 0.0
  %200 = vmatpush1.msra.mxu0 %v49
  %201 = vmatprep.subr.mxu0 0.0
  %202 = vmatpush1.msra.mxu0 %v50
  %203 = vmatprep.subr.mxu0 0.0
  %204 = vmatpush1.msra.mxu0 %v51
  %205 = vmatprep.subr.mxu0 0.0
  %206 = vmatpush1.msra.mxu0 %v52
  %207 = vmatprep.subr.mxu0 0.0
  %208 = vmatpush1.msra.mxu0 %v53
  %209 = vmatprep.subr.mxu0 0.0
  %210 = vmatpush1.msra.mxu0 %v54
  %211 = vmatprep.subr.mxu0 0.0
  %212 = vmatpush1.msra.mxu0 %v55
  %213 = vmatprep.subr.mxu0 0.0
  %214 = vmatpush1.msra.mxu0 %v56
  %215 = vmatprep.subr.mxu0 0.0
  %216 = vmatpush1.msra.mxu0 %v57
  %217 = vmatprep.subr.mxu0 0.0
  %218 = vmatpush1.msra.mxu0 %v58
  %219 = vmatprep.subr.mxu0 0.0
  %220 = vmatpush1.msra.mxu0 %v59
  %221 = vmatprep.subr.mxu0 0.0
  %222 = vmatpush1.msra.mxu0 %v60
  %223 = vmatprep.subr.mxu0 0.0
  %224 = vmatpush1.msra.mxu0 %v61
  %225 = vmatprep.subr.mxu0 0.0
  %226 = vmatpush1.msra.mxu0 %v62
  %227 = vmatprep.subr.mxu0 0.0
  %228 = vmatpush1.msra.mxu0 %v63
  %229 = vmatprep.subr.mxu0 0.0
  %230 = vmatpush1.msra.mxu0 %v64
  %231 = vmatprep.subr.mxu0 0.0
  %232 = vmatpush1.msra.mxu0 %v65
  %233 = vmatprep.mubr.f32.mxu0 %v27
  %234 = vmatmul.mubr.f32.gmra.mrb[0].mxu0 %v26
  %v235 = vpop.f32.mrb[0].mxu0
  %v236 = vadd.f32 %v167, %v235
  %v237 = vpop.f32.mrb[0].mxu0
  %238 = vdwg.mxu0
  %239 = vmatprep.subr.mxu0 0.0
  %240 = vmatpush1.msra.mxu0 %v66
  %241 = vmatprep.subr.mxu0 0.0
  %242 = vmatpush1.msra.mxu0 %v67
  %243 = vmatprep.subr.mxu0 0.0
  %244 = vmatpush1.msra.mxu0 %v68
  %245 = vmatprep.subr.mxu0 0.0
  %246 = vmatpush1.msra.mxu0 %v69
  %247 = vmatprep.subr.mxu0 0.0
  %248 = vmatpush1.msra.mxu0 %v70
  %249 = vmatprep.subr.mxu0 0.0
  %250 = vmatpush1.msra.mxu0 %v71
  %251 = vmatprep.subr.mxu0 0.0
  %252 = vmatpush1.msra.mxu0 %v72
  %253 = vmatprep.subr.mxu0 0.0
  %254 = vmatpush1.msra.mxu0 %v73
  %255 = vmatprep.subr.mxu0 0.0
  %256 = vmatpush1.msra.mxu0 %v74
  %257 = vmatprep.subr.mxu0 0.0
  %258 = vmatpush1.msra.mxu0 %v75
  %259 = vmatprep.subr.mxu0 0.0
  %260 = vmatpush1.msra.mxu0 %v76
  %261 = vmatprep.subr.mxu0 0.0
  %262 = vmatpush1.msra.mxu0 %v77
  %263 = vmatprep.subr.mxu0 0.0
  %264 = vmatpush1.msra.mxu0 %v78
  %265 = vmatprep.subr.mxu0 0.0
  %266 = vmatpush1.msra.mxu0 %v79
  %267 = vmatprep.subr.mxu0 0.0
  %268 = vmatpush1.msra.mxu0 %v80
  %269 = vmatprep.subr.mxu0 0.0
  %270 = vmatpush1.msra.mxu0 %v81
  %271 = vmatprep.subr.mxu0 0.0
  %272 = vmatpush1.msra.mxu0 %v82
  %273 = vmatprep.subr.mxu0 0.0
  %274 = vmatpush1.msra.mxu0 %v83
  %275 = vmatprep.subr.mxu0 0.0
  %276 = vmatpush1.msra.mxu0 %v84
  %277 = vmatprep.subr.mxu0 0.0
  %278 = vmatpush1.msra.mxu0 %v85
  %279 = vmatprep.subr.mxu0 0.0
  %280 = vmatpush1.msra.mxu0 %v86
  %281 = vmatprep.subr.mxu0 0.0
  %282 = vmatpush1.msra.mxu0 %v87
  %283 = vmatprep.subr.mxu0 0.0
  %284 = vmatpush1.msra.mxu0 %v88
  %285 = vmatprep.subr.mxu0 0.0
  %286 = vmatpush1.msra.mxu0 %v89
  %287 = vmatprep.subr.mxu0 0.0
  %288 = vmatpush1.msra.mxu0 %v90
  %289 = vmatprep.subr.mxu0 0.0
  %290 = vmatpush1.msra.mxu0 %v91
  %291 = vmatprep.subr.mxu0 0.0
  %292 = vmatpush1.msra.mxu0 %v92
  %293 = vmatprep.subr.mxu0 0.0
  %294 = vmatpush1.msra.mxu0 %v93
  %295 = vmatprep.subr.mxu0 0.0
  %296 = vmatpush1.msra.mxu0 %v94
  %297 = vmatprep.subr.mxu0 0.0
  %298 = vmatpush1.msra.mxu0 %v95
  %299 = vmatprep.subr.mxu0 0.0
  %300 = vmatpush1.msra.mxu0 %v96
  %301 = vmatprep.subr.mxu0 0.0
  %302 = vmatpush1.msra.mxu0 %v97
  %303 = vmatprep.mubr.f32.mxu0 %v29
  %304 = vmatmul.mubr.f32.gmra.mrb[0].mxu0 %v28
  %v305 = vpop.f32.mrb[0].mxu0
  %v306 = vadd.f32 %v236, %v305
  %v307 = vpop.f32.mrb[0].mxu0
  %308 = vdwg.mxu0
  %309 = vmatprep.subr.mxu0 0.0
  %310 = vmatpush1.msra.mxu0 %v98
  %311 = vmatprep.subr.mxu0 0.0
  %312 = vmatpush1.msra.mxu0 %v99
  %313 = vmatprep.subr.mxu0 0.0
  %314 = vmatpush1.msra.mxu0 %v100
  %315 = vmatprep.subr.mxu0 0.0
  %316 = vmatpush1.msra.mxu0 %v101
  %317 = vmatprep.subr.mxu0 0.0
  %318 = vmatpush1.msra.mxu0 %v102
  %319 = vmatprep.subr.mxu0 0.0
  %320 = vmatpush1.msra.mxu0 %v103
  %321 = vmatprep.subr.mxu0 0.0
  %322 = vmatpush1.msra.mxu0 %v104
  %323 = vmatprep.subr.mxu0 0.0
  %324 = vmatpush1.msra.mxu0 %v105
  %325 = vmatprep.subr.mxu0 0.0
  %326 = vmatpush1.msra.mxu0 %v106
  %327 = vmatprep.subr.mxu0 0.0
  %328 = vmatpush1.msra.mxu0 %v107
  %329 = vmatprep.subr.mxu0 0.0
  %330 = vmatpush1.msra.mxu0 %v108
  %331 = vmatprep.subr.mxu0 0.0
  %332 = vmatpush1.msra.mxu0 %v109
  %333 = vmatprep.subr.mxu0 0.0
  %334 = vmatpush1.msra.mxu0 %v110
  %335 = vmatprep.subr.mxu0 0.0
  %336 = vmatpush1.msra.mxu0 %v111
  %337 = vmatprep.subr.mxu0 0.0
  %338 = vmatpush1.msra.mxu0 %v112
  %339 = vmatprep.subr.mxu0 0.0
  %340 = vmatpush1.msra.mxu0 %v113
  %341 = vmatprep.subr.mxu0 0.0
  %342 = vmatpush1.msra.mxu0 %v114
  %343 = vmatprep.subr.mxu0 0.0
  %344 = vmatpush1.msra.mxu0 %v115
  %345 = vmatprep.subr.mxu0 0.0
  %346 = vmatpush1.msra.mxu0 %v116
  %347 = vmatprep.subr.mxu0 0.0
  %348 = vmatpush1.msra.mxu0 %v117
  %349 = vmatprep.subr.mxu0 0.0
  %350 = vmatpush1.msra.mxu0 %v118
  %351 = vmatprep.subr.mxu0 0.0
  %352 = vmatpush1.msra.mxu0 %v119
  %353 = vmatprep.subr.mxu0 0.0
  %354 = vmatpush1.msra.mxu0 %v120
  %355 = vmatprep.subr.mxu0 0.0
  %356 = vmatpush1.msra.mxu0 %v121
  %357 = vmatprep.subr.mxu0 0.0
  %358 = vmatpush1.msra.mxu0 %v122
  %359 = vmatprep.subr.mxu0 0.0
  %360 = vmatpush1.msra.mxu0 %v123
  %361 = vmatprep.subr.mxu0 0.0
  %362 = vmatpush1.msra.mxu0 %v124
  %363 = vmatprep.subr.mxu0 0.0
  %364 = vmatpush1.msra.mxu0 %v125
  %365 = vmatprep.subr.mxu0 0.0
  %366 = vmatpush1.msra.mxu0 %v126
  %367 = vmatprep.subr.mxu0 0.0
  %368 = vmatpush1.msra.mxu0 %v127
  %369 = vmatprep.subr.mxu0 0.0
  %370 = vmatpush1.msra.mxu0 %v128
  %371 = vmatprep.subr.mxu0 0.0
  %372 = vmatpush1.msra.mxu0 %v129
  %373 = vmatprep.mubr.f32.mxu0 %v31
  %374 = vmatmul.mubr.f32.gmra.mrb[0].mxu0 %v30
  %v375 = vpop.f32.mrb[0].mxu0
  %v376 = vadd.f32 %v306, %v375
  %v377 = vpop.f32.mrb[0].mxu0
  %378 = vdwg.mxu0
  %379 = vmatprep.subr.mxu0 0.0
  %380 = vmatpush1.msra.mxu0 %v130
  %381 = vmatprep.subr.mxu0 0.0
  %382 = vmatpush1.msra.mxu0 %v131
  %383 = vmatprep.subr.mxu0 0.0
  %384 = vmatpush1.msra.mxu0 %v132
  %385 = vmatprep.subr.mxu0 0.0
  %386 = vmatpush1.msra.mxu0 %v133
  %387 = vmatprep.subr.mxu0 0.0
  %388 = vmatpush1.msra.mxu0 %v134
  %389 = vmatprep.subr.mxu0 0.0
  %390 = vmatpush1.msra.mxu0 %v135
  %391 = vmatprep.subr.mxu0 0.0
  %392 = vmatpush1.msra.mxu0 %v136
  %393 = vmatprep.subr.mxu0 0.0
  %394 = vmatpush1.msra.mxu0 %v137
  %395 = vmatprep.subr.mxu0 0.0
  %396 = vmatpush1.msra.mxu0 %v138
  %397 = vmatprep.subr.mxu0 0.0
  %398 = vmatpush1.msra.mxu0 %v139
  %399 = vmatprep.subr.mxu0 0.0
  %400 = vmatpush1.msra.mxu0 %v140
  %401 = vmatprep.subr.mxu0 0.0
  %402 = vmatpush1.msra.mxu0 %v141
  %403 = vmatprep.subr.mxu0 0.0
  %404 = vmatpush1.msra.mxu0 %v142
  %405 = vmatprep.subr.mxu0 0.0
  %406 = vmatpush1.msra.mxu0 %v143
  %407 = vmatprep.subr.mxu0 0.0
  %408 = vmatpush1.msra.mxu0 %v144
  %409 = vmatprep.subr.mxu0 0.0
  %410 = vmatpush1.msra.mxu0 %v145
  %411 = vmatprep.subr.mxu0 0.0
  %412 = vmatpush1.msra.mxu0 %v146
  %413 = vmatprep.subr.mxu0 0.0
  %414 = vmatpush1.msra.mxu0 %v147
  %415 = vmatprep.subr.mxu0 0.0
  %416 = vmatpush1.msra.mxu0 %v148
  %417 = vmatprep.subr.mxu0 0.0
  %418 = vmatpush1.msra.mxu0 %v149
  %419 = vmatprep.subr.mxu0 0.0
  %420 = vmatpush1.msra.mxu0 %v150
  %421 = vmatprep.subr.mxu0 0.0
  %422 = vmatpush1.msra.mxu0 %v151
  %423 = vmatprep.subr.mxu0 0.0
  %424 = vmatpush1.msra.mxu0 %v152
  %425 = vmatprep.subr.mxu0 0.0
  %426 = vmatpush1.msra.mxu0 %v153
  %427 = vmatprep.subr.mxu0 0.0
  %428 = vmatpush1.msra.mxu0 %v154
  %429 = vmatprep.subr.mxu0 0.0
  %430 = vmatpush1.msra.mxu0 %v155
  %431 = vmatprep.subr.mxu0 0.0
  %432 = vmatpush1.msra.mxu0 %v156
  %433 = vmatprep.subr.mxu0 0.0
  %434 = vmatpush1.msra.mxu0 %v157
  %435 = vmatprep.subr.mxu0 0.0
  %436 = vmatpush1.msra.mxu0 %v158
  %437 = vmatprep.subr.mxu0 0.0
  %438 = vmatpush1.msra.mxu0 %v159
  %439 = vmatprep.subr.mxu0 0.0
  %440 = vmatpush1.msra.mxu0 %v160
  %441 = vmatprep.subr.mxu0 0.0
  %442 = vmatpush1.msra.mxu0 %v161
  %443 = vmatprep.mubr.f32.mxu0 %v33
  %444 = vmatmul.mubr.f32.gmra.mrb[0].mxu0 %v32
  %v445 = vpop.f32.mrb[0].mxu0
  %v446 = vadd.f32 %v376, %v445
  %v447 = vpop.f32.mrb[0].mxu0
  %448 = vdwg.mxu0
  %v449 = vmax.f32 %v446, 0.0
  %v450 = vld [vmem:[%s3] sm:$0xff]
  %v451 = vld [vmem:[%s3 + $0x8] sm:$0xff]
  %v452 = vld [vmem:[%s3 + $0x10] sm:$0xff]
  %v453 = vld [vmem:[%s3 + $0x18] sm:$0xff]
  %v454 = vld [vmem:[%s3 + $0x20] sm:$0xff]
  %v455 = vld [vmem:[%s3 + $0x28] sm:$0xff]
  %v456 = vld [vmem:[%s3 + $0x30] sm:$0xff]
  %v457 = vld [vmem:[%s3 + $0x38] sm:$0xff]
  %v458 = vld [vmem:[%s3 + $0x40] sm:$0xff]
  %v459 = vld [vmem:[%s3 + $0x48] sm:$0xff]
  %v460 = vld [vmem:[%s3 + $0x50] sm:$0xff]
  %v461 = vld [vmem:[%s3 + $0x58] sm:$0xff]
  %v462 = vld [vmem:[%s3 + $0x60] sm:$0xff]
  %v463 = vld [vmem:[%s3 + $0x68] sm:$0xff]
  %v464 = vld [vmem:[%s3 + $0x70] sm:$0xff]
  %v465 = vld [vmem:[%s3 + $0x78] sm:$0xff]
  %v466 = vld [vmem:[%s4] sm:$0x1]
  %v468 = vlaneseq
  %v469 = vshrl.u32 %v468, 7
  %v470 = vsub.s32 0, %v469
  %v471 = vrot.slane %v466, %v470
  %473 = vmatprep.subr.mxu0 0.0
  %474 = vmatpush1.msra.mxu0 %v450
  %475 = vmatprep.subr.mxu0 0.0
  %476 = vmatpush1.msra.mxu0 %v451
  %477 = vmatprep.subr.mxu0 0.0
  %478 = vmatpush1.msra.mxu0 %v452
  %479 = vmatprep.subr.mxu0 0.0
  %480 = vmatpush1.msra.mxu0 %v453
  %481 = vmatprep.subr.mxu0 0.0
  %482 = vmatpush1.msra.mxu0 %v454
  %483 = vmatprep.subr.mxu0 0.0
  %484 = vmatpush1.msra.mxu0 %v455
  %485 = vmatprep.subr.mxu0 0.0
  %486 = vmatpush1.msra.mxu0 %v456
  %487 = vmatprep.subr.mxu0 0.0
  %488 = vmatpush1.msra.mxu0 %v457
  %489 = vmatprep.subr.mxu0 0.0
  %490 = vmatpush1.msra.mxu0 %v458
  %491 = vmatprep.subr.mxu0 0.0
  %492 = vmatpush1.msra.mxu0 %v459
  %493 = vmatprep.subr.mxu0 0.0
  %494 = vmatpush1.msra.mxu0 %v460
  %495 = vmatprep.subr.mxu0 0.0
  %496 = vmatpush1.msra.mxu0 %v461
  %497 = vmatprep.subr.mxu0 0.0
  %498 = vmatpush1.msra.mxu0 %v462
  %499 = vmatprep.subr.mxu0 0.0
  %500 = vmatpush1.msra.mxu0 %v463
  %501 = vmatprep.subr.mxu0 0.0
  %502 = vmatpush1.msra.mxu0 %v464
  %503 = vmatprep.subr.mxu0 0.0
  %504 = vmatpush1.msra.mxu0 %v465
  %505 = vmatprep.subr.mxu0 0.0
  %506 = vmatpush1.msra.mxu0 0.0
  %507 = vmatprep.subr.mxu0 0.0
  %508 = vmatpush1.msra.mxu0 0.0
  %509 = vmatprep.subr.mxu0 0.0
  %510 = vmatpush1.msra.mxu0 0.0
  %511 = vmatprep.subr.mxu0 0.0
  %512 = vmatpush1.msra.mxu0 0.0
  %513 = vmatprep.subr.mxu0 0.0
  %514 = vmatpush1.msra.mxu0 0.0
  %515 = vmatprep.subr.mxu0 0.0
  %516 = vmatpush1.msra.mxu0 0.0
  %517 = vmatprep.subr.mxu0 0.0
  %518 = vmatpush1.msra.mxu0 0.0
  %519 = vmatprep.subr.mxu0 0.0
  %520 = vmatpush1.msra.mxu0 0.0
  %521 = vmatprep.subr.mxu0 0.0
  %522 = vmatpush1.msra.mxu0 0.0
  %523 = vmatprep.subr.mxu0 0.0
  %524 = vmatpush1.msra.mxu0 0.0
  %525 = vmatprep.subr.mxu0 0.0
  %526 = vmatpush1.msra.mxu0 0.0
  %527 = vmatprep.subr.mxu0 0.0
  %528 = vmatpush1.msra.mxu0 0.0
  %529 = vmatprep.subr.mxu0 0.0
  %530 = vmatpush1.msra.mxu0 0.0
  %531 = vmatprep.subr.mxu0 0.0
  %532 = vmatpush1.msra.mxu0 0.0
  %533 = vmatprep.subr.mxu0 0.0
  %534 = vmatpush1.msra.mxu0 0.0
  %535 = vmatprep.subr.mxu0 0.0
  %536 = vmatpush1.msra.mxu0 0.0
  %537 = vmatprep.mubr.f32.mxu0 0.0
  %538 = vmatmul.mubr.f32.gmra.mrb[0].mxu0 %v449
  %v539 = vpop.f32.mrb[0].mxu0
  %v540 = vadd.f32 %v471, %v539
  %v541 = vpop.f32.mrb[0].mxu0
  %542 = vdwg.mxu0
  %v543 = vmax.f32 %v540, 0.0
  %v544 = vld [vmem:[%s5] sm:$0xff]
  %v545 = vld [vmem:[%s5 + $0x8] sm:$0xff]
  %v546 = vld [vmem:[%s5 + $0x10] sm:$0xff]
  %v547 = vld [vmem:[%s5 + $0x18] sm:$0xff]
  %v548 = vld [vmem:[%s5 + $0x20] sm:$0xff]
  %v549 = vld [vmem:[%s5 + $0x28] sm:$0xff]
  %v550 = vld [vmem:[%s5 + $0x30] sm:$0xff]
  %v551 = vld [vmem:[%s5 + $0x38] sm:$0xff]
  %v552 = vld [vmem:[%s5 + $0x40] sm:$0xff]
  %v553 = vld [vmem:[%s5 + $0x48] sm:$0xff]
  %v554 = vld [vmem:[%s5 + $0x50] sm:$0xff]
  %v555 = vld [vmem:[%s5 + $0x58] sm:$0xff]
  %v556 = vld [vmem:[%s5 + $0x60] sm:$0xff]
  %v557 = vld [vmem:[%s5 + $0x68] sm:$0xff]
  %v558 = vld [vmem:[%s5 + $0x70] sm:$0xff]
  %v559 = vld [vmem:[%s5 + $0x78] sm:$0xff]
  %v560 = vld [vmem:[%s6] sm:$0x1]
  %v562 = vlaneseq
  %v563 = vshrl.u32 %v562, 7
  %v564 = vsub.s32 0, %v563
  %v565 = vrot.slane %v560, %v564
  %567 = vmatprep.subr.mxu0 0.0
  %568 = vmatpush1.msra.mxu0 %v544
  %569 = vmatprep.subr.mxu0 0.0
  %570 = vmatpush1.msra.mxu0 %v545
  %571 = vmatprep.subr.mxu0 0.0
  %572 = vmatpush1.msra.mxu0 %v546
  %573 = vmatprep.subr.mxu0 0.0
  %574 = vmatpush1.msra.mxu0 %v547
  %575 = vmatprep.subr.mxu0 0.0
  %576 = vmatpush1.msra.mxu0 %v548
  %577 = vmatprep.subr.mxu0 0.0
  %578 = vmatpush1.msra.mxu0 %v549
  %579 = vmatprep.subr.mxu0 0.0
  %580 = vmatpush1.msra.mxu0 %v550
  %581 = vmatprep.subr.mxu0 0.0
  %582 = vmatpush1.msra.mxu0 %v551
  %583 = vmatprep.subr.mxu0 0.0
  %584 = vmatpush1.msra.mxu0 %v552
  %585 = vmatprep.subr.mxu0 0.0
  %586 = vmatpush1.msra.mxu0 %v553
  %587 = vmatprep.subr.mxu0 0.0
  %588 = vmatpush1.msra.mxu0 %v554
  %589 = vmatprep.subr.mxu0 0.0
  %590 = vmatpush1.msra.mxu0 %v555
  %591 = vmatprep.subr.mxu0 0.0
  %592 = vmatpush1.msra.mxu0 %v556
  %593 = vmatprep.subr.mxu0 0.0
  %594 = vmatpush1.msra.mxu0 %v557
  %595 = vmatprep.subr.mxu0 0.0
  %596 = vmatpush1.msra.mxu0 %v558
  %597 = vmatprep.subr.mxu0 0.0
  %598 = vmatpush1.msra.mxu0 %v559
  %599 = vmatprep.subr.mxu0 0.0
  %600 = vmatpush1.msra.mxu0 0.0
  %601 = vmatprep.subr.mxu0 0.0
  %602 = vmatpush1.msra.mxu0 0.0
  %603 = vmatprep.subr.mxu0 0.0
  %604 = vmatpush1.msra.mxu0 0.0
  %605 = vmatprep.subr.mxu0 0.0
  %606 = vmatpush1.msra.mxu0 0.0
  %607 = vmatprep.subr.mxu0 0.0
  %608 = vmatpush1.msra.mxu0 0.0
  %609 = vmatprep.subr.mxu0 0.0
  %610 = vmatpush1.msra.mxu0 0.0
  %611 = vmatprep.subr.mxu0 0.0
  %612 = vmatpush1.msra.mxu0 0.0
  %613 = vmatprep.subr.mxu0 0.0
  %614 = vmatpush1.msra.mxu0 0.0
  %615 = vmatprep.subr.mxu0 0.0
  %616 = vmatpush1.msra.mxu0 0.0
  %617 = vmatprep.subr.mxu0 0.0
  %618 = vmatpush1.msra.mxu0 0.0
  %619 = vmatprep.subr.mxu0 0.0
  %620 = vmatpush1.msra.mxu0 0.0
  %621 = vmatprep.subr.mxu0 0.0
  %622 = vmatpush1.msra.mxu0 0.0
  %623 = vmatprep.subr.mxu0 0.0
  %624 = vmatpush1.msra.mxu0 0.0
  %625 = vmatprep.subr.mxu0 0.0
  %626 = vmatpush1.msra.mxu0 0.0
  %627 = vmatprep.subr.mxu0 0.0
  %628 = vmatpush1.msra.mxu0 0.0
  %629 = vmatprep.subr.mxu0 0.0
  %630 = vmatpush1.msra.mxu0 0.0
  %631 = vmatprep.mubr.f32.mxu0 0.0
  %632 = vmatmul.mubr.f32.gmra.mrb[0].mxu0 %v543
  %v633 = vpop.f32.mrb[0].mxu0
  %v634 = vadd.f32 %v565, %v633
  %v635 = vpop.f32.mrb[0].mxu0
  %636 = vdwg.mxu0
  %637 = vst [vmem:[%s7] sm:$0xff] %v634
  // Predicated region
  $region30: #{symbolnet_forward.5} parent=0 // pred_check
    _
  $region31: #{symbolnet_forward.5} parent=0 // pred_check_branch
    %639 = sbr.rel (0) target = $region33
  $region32: #{symbolnet_forward.5} parent=0 // pred_region
    _
  $region33: #{symbolnet_forward.5} parent=0 // pred_fallthru
    _
  // Predicated region
  $region34: #{symbolnet_forward.5} parent=0 // pred_check
    _
  $region35: #{symbolnet_forward.5} parent=0 // pred_check_branch
    %641 = sbr.rel (0) target = $region37
  $region36: #{symbolnet_forward.5} parent=0 // pred_region
    _
  $region37: #{symbolnet_forward.5} parent=0 // pred_fallthru
    _

</llo_original>
